<compile_context>
chip_gen: v7x
topology: tpu7x:2x2x1
jax: 0.10.0
libtpu: 0.0.40
codegen_flags: <defaults>
</compile_context>

<pallas_src>
import functools

import jax
import jax.numpy as jnp
from jax import lax
from jax.experimental import pallas as pl
from jax.experimental.pallas import tpu as pltpu


LANE = 128                               # channel dims padded to a multiple of this
_VMEM_LIMIT_BYTES = 32 * 1024 * 1024     # explicit scoped-VMEM limit (headroom on v7x)
_TILE_BUDGET_BYTES = 8 << 20             # per-tile VMEM budget used to size tile_h


def _round_up(n, m):
    return ((n + m - 1) // m) * m


def _pick_tile_h(H, W, C, d, budget_bytes=_TILE_BUDGET_BYTES):
    """Largest divisor of H whose halo'd bf16 tile (DMA landing buffer +
    W-padded work buffer + double-buffered output block) fits the per-tile
    VMEM budget.  Prefers >= 2 tiles along H so the (batch x tile) grid has
    enough steps to pipeline and to feed both v7x TensorCores even at N=1."""
    wpad = max(16, _round_up(d, 16))

    def tile_bytes(t):
        rows = t + 2 * d
        return (rows * W * C * 2                 # raw DMA landing buffer (bf16)
                + rows * (W + 2 * wpad) * C * 2  # zero-padded work buffer (bf16)
                + 2 * t * W * C * 2)             # double-buffered bf16 output block

    # halo DMA pulls d rows from the neighbouring tile -> need t >= d when tiled
    cands = [t for t in range(1, H + 1)
             if H % t == 0 and (t >= d or H // t == 1)]
    fitting = [t for t in cands if tile_bytes(t) <= budget_bytes] or [min(cands)]
    multi = [t for t in fitting if H // t >= 2]
    return max(multi) if multi else max(fitting)


# ----------------------------------------------------------------------------
# In-kernel helpers
# ----------------------------------------------------------------------------
def _fetch_rows_with_halo(x_hbm, xbuf, sem, n, t, nh, *, tile_h, d):
    """DMA rows [t*tile_h - d, t*tile_h + tile_h + d) of image n from HBM into
    xbuf (full width, all channels).  Rows outside the image are never copied
    (the caller masks them to zero), so no host-side padding is needed."""
    row0 = t * tile_h

    def body_copy():
        return pltpu.make_async_copy(
            x_hbm.at[n, pl.ds(row0, tile_h), :, :],
            xbuf.at[pl.ds(d, tile_h), :, :],
            sem.at[0])

    def top_copy():
        return pltpu.make_async_copy(
            x_hbm.at[n, pl.ds(row0 - d, d), :, :],
            xbuf.at[pl.ds(0, d), :, :],
            sem.at[1])

    def bot_copy():
        return pltpu.make_async_copy(
            x_hbm.at[n, pl.ds(row0 + tile_h, d), :, :],
            xbuf.at[pl.ds(tile_h + d, d), :, :],
            sem.at[2])

    body_copy().start()

    @pl.when(t > 0)
    def _():
        top_copy().start()

    @pl.when(t < nh - 1)
    def _():
        bot_copy().start()

    body_copy().wait()

    @pl.when(t > 0)
    def _():
        top_copy().wait()

    @pl.when(t < nh - 1)
    def _():
        bot_copy().wait()


def _fill_padded_tile(xpad, val, *, W, wpad):
    """Write `val` into the centre columns of the W-padded work tile and zero
    the side strips (the dilation halo along W).  wpad is a multiple of the
    bf16 sublane tile (16), so these windows are tile-aligned stores."""
    rows, _, c = val.shape
    zeros = jnp.zeros((rows, wpad, c), xpad.dtype)
    xpad[:, 0:wpad, :] = zeros
    xpad[:, wpad + W:, :] = zeros
    xpad[:, wpad:wpad + W, :] = val


def _conv3x3_taps(xpad, w3_ref, *, tile_h, W, d, wpad, cp):
    """Dilated 3x3 conv as 9 lane-dense (tile_h*W, C) @ (C, C) MXU matmuls
    with f32 accumulation.  The W shift is materialized once per kw (3 shifted
    views, not 9); the H shift is a free slice along the untiled leading axis."""
    acc = jnp.zeros((tile_h * W, cp), jnp.float32)
    for kw in range(3):
        c0 = wpad + (kw - 1) * d
        xs = xpad[:, c0:c0 + W, :]                 # one realigned copy per kw
        for kh in range(3):
            tap = xs[kh * d:kh * d + tile_h]       # free leading-axis slice
            acc = acc + jnp.dot(tap.reshape(tile_h * W, cp), w3_ref[kh, kw],
                                preferred_element_type=jnp.float32)
    return acc


# ----------------------------------------------------------------------------
# Kernels
# ----------------------------------------------------------------------------
def _dconv_kernel(x_hbm, w3_ref, o_ref, xbuf, xpad, sem,
                  *, H, W, tile_h, d, wpad, cp):
    """Dilated 3x3 conv (no bias) + ReLU on one (tile_h x W) output tile."""
    n, t = pl.program_id(0), pl.program_id(1)
    nh = pl.num_programs(1)
    rows = tile_h + 2 * d

    _fetch_rows_with_halo(x_hbm, xbuf, sem, n, t, nh, tile_h=tile_h, d=d)

    # zero rows that fall outside the image (top/bottom conv padding)
    gy = (t * tile_h - d) + lax.broadcasted_iota(jnp.int32, (rows, 1, 1), 0)
    val = jnp.where((gy >= 0) & (gy < H), xbuf[...], 0.0)

    _fill_padded_tile(xpad, val, W=W, wpad=wpad)
    acc = _conv3x3_taps(xpad, w3_ref, tile_h=tile_h, W=W, d=d, wpad=wpad, cp=cp)
    o_ref[0] = jnp.maximum(acc, 0.0).reshape(tile_h, W, cp).astype(o_ref.dtype)


def _hoist_dconv_kernel(x_hbm, hw_ref, hb_ref, w3_ref, o_ref, xbuf, xpad, sem,
                        *, H, W, tile_h, d, wpad, cin, cp):
    """Fused (1x1 conv + bias) -> dilated 3x3 conv -> ReLU on one tile."""
    n, t = pl.program_id(0), pl.program_id(1)
    nh = pl.num_programs(1)
    rows = tile_h + 2 * d

    _fetch_rows_with_halo(x_hbm, xbuf, sem, n, t, nh, tile_h=tile_h, d=d)

    # fused 1x1 hoist conv + bias over the halo'd tile, f32 accumulation
    h = jnp.dot(xbuf[...].reshape(rows * W, cin), hw_ref[...],
                preferred_element_type=jnp.float32) + hb_ref[...]
    h = h.reshape(rows, W, cp)
    # conv padding must be zero AFTER the hoist (hoist(0) == bias != 0)
    gy = (t * tile_h - d) + lax.broadcasted_iota(jnp.int32, (rows, 1, 1), 0)
    val = jnp.where((gy >= 0) & (gy < H), h, 0.0).astype(xpad.dtype)

    _fill_padded_tile(xpad, val, W=W, wpad=wpad)
    acc = _conv3x3_taps(xpad, w3_ref, tile_h=tile_h, W=W, d=d, wpad=wpad, cp=cp)
    o_ref[0] = jnp.maximum(acc, 0.0).reshape(tile_h, W, cp).astype(o_ref.dtype)


def _pointwise_kernel(x_ref, w_ref, b_ref, o_ref):
    """1x1 conv + bias (used only when D_list is empty)."""
    th, W, cin = x_ref.shape[1], x_ref.shape[2], x_ref.shape[3]
    cp = o_ref.shape[-1]
    y = jnp.dot(x_ref[0].reshape(th * W, cin), w_ref[...],
                preferred_element_type=jnp.float32) + b_ref[...]
    o_ref[0] = y.reshape(th, W, cp).astype(o_ref.dtype)


# ----------------------------------------------------------------------------
# pallas_call wrappers
# ----------------------------------------------------------------------------
def _dilated_conv_layer(x, w3, d, *, hoist_w=None, hoist_b=None):
    """One 3x3 dilated conv (padding=d, dilation=d, no bias) + ReLU layer,
    optionally with a fused leading 1x1 conv (+bias).  x is NHWC bf16 with
    channels already padded to a multiple of 128; returns NHWC bf16."""
    N, H, W, c_in = x.shape
    cp = w3.shape[-1]
    tile_h = _pick_tile_h(H, W, max(c_in, cp), d)
    nh = H // tile_h
    rows = tile_h + 2 * d
    wpad = max(16, _round_up(d, 16))     # sublane-tile aligned side padding
    fused = hoist_w is not None

    if fused:
        kern = functools.partial(_hoist_dconv_kernel, H=H, W=W, tile_h=tile_h,
                                 d=d, wpad=wpad, cin=c_in, cp=cp)
        in_specs = [
            pl.BlockSpec(memory_space=pl.ANY),                  # activation (HBM)
            pl.BlockSpec((c_in, cp), lambda n, t: (0, 0)),      # 1x1 weight
            pl.BlockSpec((1, cp), lambda n, t: (0, 0)),         # 1x1 bias (f32)
            pl.BlockSpec((3, 3, cp, cp), lambda n, t: (0, 0, 0, 0)),
        ]
        args = (x, hoist_w, hoist_b, w3)
    else:
        kern = functools.partial(_dconv_kernel, H=H, W=W, tile_h=tile_h,
                                 d=d, wpad=wpad, cp=cp)
        in_specs = [
            pl.BlockSpec(memory_space=pl.ANY),                  # activation (HBM)
            pl.BlockSpec((3, 3, cp, cp), lambda n, t: (0, 0, 0, 0)),
        ]
        args = (x, w3)

    return pl.pallas_call(
        kern,
        out_shape=jax.ShapeDtypeStruct((N, H, W, cp), jnp.bfloat16),
        grid_spec=pltpu.PrefetchScalarGridSpec(
            num_scalar_prefetch=0,
            grid=(N, nh),
            in_specs=in_specs,
            out_specs=pl.BlockSpec((1, tile_h, W, cp),
                                   lambda n, t: (n, t, 0, 0)),
            scratch_shapes=[
                pltpu.VMEM((rows, W, c_in), jnp.bfloat16),             # DMA dst
                pltpu.VMEM((rows, W + 2 * wpad, cp), jnp.bfloat16),    # padded tile
                pltpu.SemaphoreType.DMA((3,)),
            ]),
        compiler_params=pltpu.CompilerParams(
            dimension_semantics=("parallel", "parallel"),
            vmem_limit_bytes=_VMEM_LIMIT_BYTES),
    )(*args)


def _pointwise_layer(x, w, b):
    """Standalone 1x1 conv + bias (only used when D_list is empty)."""
    N, H, W, cin = x.shape
    cp = w.shape[-1]
    tile_h = _pick_tile_h(H, W, max(cin, cp), 0)
    return pl.pallas_call(
        _pointwise_kernel,
        out_shape=jax.ShapeDtypeStruct((N, H, W, cp), jnp.bfloat16),
        grid_spec=pltpu.PrefetchScalarGridSpec(
            num_scalar_prefetch=0,
            grid=(N, H // tile_h),
            in_specs=[
                pl.BlockSpec((1, tile_h, W, cin), lambda n, t: (n, t, 0, 0)),
                pl.BlockSpec((cin, cp), lambda n, t: (0, 0)),
                pl.BlockSpec((1, cp), lambda n, t: (0, 0)),
            ],
            out_specs=pl.BlockSpec((1, tile_h, W, cp),
                                   lambda n, t: (n, t, 0, 0))),
        compiler_params=pltpu.CompilerParams(
            dimension_semantics=("parallel", "parallel"),
            vmem_limit_bytes=_VMEM_LIMIT_BYTES),
    )(x, w, b)


# ----------------------------------------------------------------------------
# Module wrapper (parameters initialized deterministically in-script)
# ----------------------------------------------------------------------------
def init_params(key, inplanes, outplanes, d_list):
    params = {"hoist": inplanes != outplanes, "dw": []}
    k = key
    if params["hoist"]:
        k, k1, k2 = jax.random.split(k, 3)
        params["hw"] = 0.1 * jax.random.normal(k1, (inplanes, outplanes),
                                               jnp.float32)
        params["hb"] = 0.1 * jax.random.normal(k2, (outplanes,), jnp.float32)
    for _ in d_list:
        k, k1 = jax.random.split(k)
        params["dw"].append(
            0.1 * jax.random.normal(k1, (3, 3, outplanes, outplanes),
                                    jnp.float32))
    return params


def dilated_spatial_path(x_nchw, params, d_list):
    """Forward pass of DilatedSpatialPath.  Accepts NCHW, returns NCHW f32."""
    hoist = params["hoist"]
    if not hoist and not d_list:
        return x_nchw                                  # module is an identity

    # NCHW -> NHWC once at the boundary; channels padded once to a lane
    # multiple so every kernel load/store/matmul is lane-dense.
    x = jnp.transpose(x_nchw, (0, 2, 3, 1))
    N, H, W, cin = x.shape
    cout = params["hw"].shape[1] if hoist else cin
    cin_p = _round_up(cin, LANE)
    cp = _round_up(cout, LANE)

    x = jnp.pad(x, ((0, 0), (0, 0), (0, 0),
                    (0, cin_p - cin))).astype(jnp.bfloat16)

    hw = hb = None
    if hoist:
        hw = jnp.pad(params["hw"],
                     ((0, cin_p - cin), (0, cp - cout))).astype(jnp.bfloat16)
        hb = jnp.pad(params["hb"],
                     (0, cp - cout)).astype(jnp.float32).reshape(1, cp)

    w3s = [jnp.pad(w, ((0, 0), (0, 0), (0, cp - cout), (0, cp - cout)))
           .astype(jnp.bfloat16) for w in params["dw"]]

    if not d_list:                                     # hoist only
        y = _pointwise_layer(x, hw, hb)
    else:
        y = x
        for i, (w3, d) in enumerate(zip(w3s, d_list)):
            if i == 0 and hoist:
                # fuse the 1x1 hoist conv into the first dilated conv: saves
                # one full HBM round trip of the activation.
                y = _dilated_conv_layer(y, w3, d, hoist_w=hw, hoist_b=hb)
            else:
                y = _dilated_conv_layer(y, w3, d)

    out = y[..., :cout].astype(jnp.float32)
    return jnp.transpose(out, (0, 3, 1, 2))


# ----------------------------------------------------------------------------
# Pure-JAX reference with the same bf16-in / f32-accumulate numerics
# ----------------------------------------------------------------------------
def _reference(x_nchw, params, d_list):
    x = jnp.transpose(x_nchw, (0, 2, 3, 1)).astype(jnp.bfloat16)
    if params["hoist"]:
        h = jnp.einsum("nhwc,cd->nhwd", x, params["hw"].astype(jnp.bfloat16),
                       preferred_element_type=jnp.float32) + params["hb"]
        x = h.astype(jnp.bfloat16)
    if d_list:
        dn = lax.conv_dimension_numbers(
            x.shape, params["dw"][0].shape, ("NHWC", "HWIO", "NHWC"))
        for w, d in zip(params["dw"], d_list):
            y = lax.conv_general_dilated(
                x, w.astype(jnp.bfloat16), window_strides=(1, 1),
                padding=[(d, d), (d, d)], rhs_dilation=(d, d),
                dimension_numbers=dn, preferred_element_type=jnp.float32)
            x = jnp.maximum(y, 0.0).astype(jnp.bfloat16)
    return jnp.transpose(x, (0, 3, 1, 2)).astype(jnp.float32)


if __name__ == "__main__":
    inplanes, outplanes = 4, 8
    D_list = (1, 2)
    N, H, W = 2, 16, 16

    key = jax.random.PRNGKey(0)
    kx, kp = jax.random.split(key)
    x = jax.random.normal(kx, (N, inplanes, H, W), jnp.float32)   # NCHW input
    params = init_params(kp, inplanes, outplanes, D_list)

    out = jax.block_until_ready(dilated_spatial_path(x, params, D_list))
    ref = jax.block_until_ready(_reference(x, params, D_list))

    assert out.shape == (N, outplanes, H, W), out.shape
    err = float(jnp.max(jnp.abs(out - ref)))
    assert err < 1e-2, f"max abs error vs reference: {err}"

    print("KERNEL_OK")
</pallas_src>

<mosaic_0001>
module attributes {stable_mosaic.version = 11 : i64} {
  func.func @_hoist_dconv_kernel(%arg0: i32, %arg1: i32, %arg2: memref<2x16x16x128xbf16, #tpu.memory_space<any>>, %arg3: memref<128x128xbf16, #tpu.memory_space<vmem>>, %arg4: memref<1x128xf32, #tpu.memory_space<vmem>>, %arg5: memref<3x3x128x128xbf16, #tpu.memory_space<vmem>>, %arg6: memref<1x8x16x128xbf16, #tpu.memory_space<vmem>>, %arg7: memref<10x16x128xbf16, #tpu.memory_space<vmem>>, %arg8: memref<10x48x128xbf16, #tpu.memory_space<vmem>>, %arg9: memref<3x!tpu.dma_semaphore, #tpu.memory_space<semaphore_mem>>) attributes {dimension_semantics = [#tpu.dimension_semantics<parallel>, #tpu.dimension_semantics<parallel>], iteration_bounds = array<i64: 2, 2>, scalar_prefetch = 0 : i64, scratch_operands = 3 : i64, tpu.core_type = #tpu.core_type<tc>, window_params = [{}, {pipeline_mode = #tpu.pipeline_mode<synchronous>, transform_indices = @transform_1, window_bounds = array<i64: 128, 128>}, {pipeline_mode = #tpu.pipeline_mode<synchronous>, transform_indices = @transform_2, window_bounds = array<i64: 1, 128>}, {pipeline_mode = #tpu.pipeline_mode<synchronous>, transform_indices = @transform_3, window_bounds = array<i64: 3, 3, 128, 128>}, {transform_indices = @transform_4, window_bounds = array<i64: 1, 8, 16, 128>}]} {
    %c8_i32 = arith.constant 8 : i32
    %0 = arith.muli %arg1, %c8_i32 : i32
    %c0_i32 = arith.constant 0 : i32
    %c0_i32_0 = arith.constant 0 : i32
    %c0_i32_1 = arith.constant 0 : i32
    %1 = tpu.memref_slice %arg2[%arg0, %0, %c0_i32_0, %c0_i32_1] : memref<2x16x16x128xbf16, #tpu.memory_space<any>> -> memref<1x8x16x128xbf16, #tpu.memory_space<any>>
    %2 = tpu.memref_squeeze %1 : memref<1x8x16x128xbf16, #tpu.memory_space<any>> -> memref<8x16x128xbf16, #tpu.memory_space<any>>
    %c1_i32 = arith.constant 1 : i32
    %c0_i32_2 = arith.constant 0 : i32
    %c0_i32_3 = arith.constant 0 : i32
    %3 = tpu.memref_slice %arg7[%c1_i32, %c0_i32_2, %c0_i32_3] : memref<10x16x128xbf16, #tpu.memory_space<vmem>> -> memref<8x16x128xbf16, #tpu.memory_space<vmem>>
    %4 = tpu.memref_slice %arg9[%c0_i32] : memref<3x!tpu.dma_semaphore, #tpu.memory_space<semaphore_mem>> -> memref<1x!tpu.dma_semaphore, #tpu.memory_space<semaphore_mem>>
    %5 = tpu.memref_squeeze %4 : memref<1x!tpu.dma_semaphore, #tpu.memory_space<semaphore_mem>> -> memref<!tpu.dma_semaphore, #tpu.memory_space<semaphore_mem>>
    tpu.enqueue_dma source(%2 : memref<8x16x128xbf16, #tpu.memory_space<any>>) target(%3 : memref<8x16x128xbf16, #tpu.memory_space<vmem>>) target_semaphore(%5 : memref<!tpu.dma_semaphore, #tpu.memory_space<semaphore_mem>>)
    %c0_i32_4 = arith.constant 0 : i32
    %6 = arith.cmpi sgt, %arg1, %c0_i32_4 : i32
    %7 = arith.extui %6 : i1 to i32
    %c0_i32_5 = arith.constant 0 : i32
    %8 = arith.cmpi ne, %7, %c0_i32_5 : i32
    scf.if %8 {
      %c1_i32_92 = arith.constant 1 : i32
      %115 = arith.subi %0, %c1_i32_92 : i32
      %c1_i32_93 = arith.constant 1 : i32
      %c0_i32_94 = arith.constant 0 : i32
      %c0_i32_95 = arith.constant 0 : i32
      %116 = tpu.memref_slice %arg2[%arg0, %115, %c0_i32_94, %c0_i32_95] : memref<2x16x16x128xbf16, #tpu.memory_space<any>> -> memref<1x1x16x128xbf16, #tpu.memory_space<any>>
      %117 = tpu.memref_squeeze %116 : memref<1x1x16x128xbf16, #tpu.memory_space<any>> -> memref<1x16x128xbf16, #tpu.memory_space<any>>
      %c0_i32_96 = arith.constant 0 : i32
      %c0_i32_97 = arith.constant 0 : i32
      %c0_i32_98 = arith.constant 0 : i32
      %118 = tpu.memref_slice %arg7[%c0_i32_96, %c0_i32_97, %c0_i32_98] : memref<10x16x128xbf16, #tpu.memory_space<vmem>> -> memref<1x16x128xbf16, #tpu.memory_space<vmem>>
      %119 = tpu.memref_slice %arg9[%c1_i32_93] : memref<3x!tpu.dma_semaphore, #tpu.memory_space<semaphore_mem>> -> memref<1x!tpu.dma_semaphore, #tpu.memory_space<semaphore_mem>>
      %120 = tpu.memref_squeeze %119 : memref<1x!tpu.dma_semaphore, #tpu.memory_space<semaphore_mem>> -> memref<!tpu.dma_semaphore, #tpu.memory_space<semaphore_mem>>
      tpu.enqueue_dma source(%117 : memref<1x16x128xbf16, #tpu.memory_space<any>>) target(%118 : memref<1x16x128xbf16, #tpu.memory_space<vmem>>) target_semaphore(%120 : memref<!tpu.dma_semaphore, #tpu.memory_space<semaphore_mem>>)
    } else {
    }
    %c1_i32_6 = arith.constant 1 : i32
    %9 = arith.cmpi slt, %arg1, %c1_i32_6 : i32
    %10 = arith.extui %9 : i1 to i32
    %c0_i32_7 = arith.constant 0 : i32
    %11 = arith.cmpi ne, %10, %c0_i32_7 : i32
    scf.if %11 {
      %c8_i32_92 = arith.constant 8 : i32
      %115 = arith.addi %0, %c8_i32_92 : i32
      %c2_i32 = arith.constant 2 : i32
      %c0_i32_93 = arith.constant 0 : i32
      %c0_i32_94 = arith.constant 0 : i32
      %116 = tpu.memref_slice %arg2[%arg0, %115, %c0_i32_93, %c0_i32_94] : memref<2x16x16x128xbf16, #tpu.memory_space<any>> -> memref<1x1x16x128xbf16, #tpu.memory_space<any>>
      %117 = tpu.memref_squeeze %116 : memref<1x1x16x128xbf16, #tpu.memory_space<any>> -> memref<1x16x128xbf16, #tpu.memory_space<any>>
      %c9_i32 = arith.constant 9 : i32
      %c0_i32_95 = arith.constant 0 : i32
      %c0_i32_96 = arith.constant 0 : i32
      %118 = tpu.memref_slice %arg7[%c9_i32, %c0_i32_95, %c0_i32_96] : memref<10x16x128xbf16, #tpu.memory_space<vmem>> -> memref<1x16x128xbf16, #tpu.memory_space<vmem>>
      %119 = tpu.memref_slice %arg9[%c2_i32] : memref<3x!tpu.dma_semaphore, #tpu.memory_space<semaphore_mem>> -> memref<1x!tpu.dma_semaphore, #tpu.memory_space<semaphore_mem>>
      %120 = tpu.memref_squeeze %119 : memref<1x!tpu.dma_semaphore, #tpu.memory_space<semaphore_mem>> -> memref<!tpu.dma_semaphore, #tpu.memory_space<semaphore_mem>>
      tpu.enqueue_dma source(%117 : memref<1x16x128xbf16, #tpu.memory_space<any>>) target(%118 : memref<1x16x128xbf16, #tpu.memory_space<vmem>>) target_semaphore(%120 : memref<!tpu.dma_semaphore, #tpu.memory_space<semaphore_mem>>)
    } else {
    }
    %c0_i32_8 = arith.constant 0 : i32
    %c0_i32_9 = arith.constant 0 : i32
    %c0_i32_10 = arith.constant 0 : i32
    %12 = tpu.memref_slice %arg2[%arg0, %0, %c0_i32_9, %c0_i32_10] : memref<2x16x16x128xbf16, #tpu.memory_space<any>> -> memref<1x8x16x128xbf16, #tpu.memory_space<any>>
    %13 = tpu.memref_squeeze %12 : memref<1x8x16x128xbf16, #tpu.memory_space<any>> -> memref<8x16x128xbf16, #tpu.memory_space<any>>
    %c1_i32_11 = arith.constant 1 : i32
    %c0_i32_12 = arith.constant 0 : i32
    %c0_i32_13 = arith.constant 0 : i32
    %14 = tpu.memref_slice %arg7[%c1_i32_11, %c0_i32_12, %c0_i32_13] : memref<10x16x128xbf16, #tpu.memory_space<vmem>> -> memref<8x16x128xbf16, #tpu.memory_space<vmem>>
    %15 = tpu.memref_slice %arg9[%c0_i32_8] : memref<3x!tpu.dma_semaphore, #tpu.memory_space<semaphore_mem>> -> memref<1x!tpu.dma_semaphore, #tpu.memory_space<semaphore_mem>>
    %16 = tpu.memref_squeeze %15 : memref<1x!tpu.dma_semaphore, #tpu.memory_space<semaphore_mem>> -> memref<!tpu.dma_semaphore, #tpu.memory_space<semaphore_mem>>
    tpu.wait_dma2 semaphore(%16 : memref<!tpu.dma_semaphore, #tpu.memory_space<semaphore_mem>>) src(%13 : memref<8x16x128xbf16, #tpu.memory_space<any>>) dst(%14 : memref<8x16x128xbf16, #tpu.memory_space<vmem>>)
    %c0_i32_14 = arith.constant 0 : i32
    %17 = arith.cmpi sgt, %arg1, %c0_i32_14 : i32
    %18 = arith.extui %17 : i1 to i32
    %c0_i32_15 = arith.constant 0 : i32
    %19 = arith.cmpi ne, %18, %c0_i32_15 : i32
    scf.if %19 {
      %c1_i32_92 = arith.constant 1 : i32
      %115 = arith.subi %0, %c1_i32_92 : i32
      %c1_i32_93 = arith.constant 1 : i32
      %c0_i32_94 = arith.constant 0 : i32
      %c0_i32_95 = arith.constant 0 : i32
      %116 = tpu.memref_slice %arg2[%arg0, %115, %c0_i32_94, %c0_i32_95] : memref<2x16x16x128xbf16, #tpu.memory_space<any>> -> memref<1x1x16x128xbf16, #tpu.memory_space<any>>
      %117 = tpu.memref_squeeze %116 : memref<1x1x16x128xbf16, #tpu.memory_space<any>> -> memref<1x16x128xbf16, #tpu.memory_space<any>>
      %c0_i32_96 = arith.constant 0 : i32
      %c0_i32_97 = arith.constant 0 : i32
      %c0_i32_98 = arith.constant 0 : i32
      %118 = tpu.memref_slice %arg7[%c0_i32_96, %c0_i32_97, %c0_i32_98] : memref<10x16x128xbf16, #tpu.memory_space<vmem>> -> memref<1x16x128xbf16, #tpu.memory_space<vmem>>
      %119 = tpu.memref_slice %arg9[%c1_i32_93] : memref<3x!tpu.dma_semaphore, #tpu.memory_space<semaphore_mem>> -> memref<1x!tpu.dma_semaphore, #tpu.memory_space<semaphore_mem>>
      %120 = tpu.memref_squeeze %119 : memref<1x!tpu.dma_semaphore, #tpu.memory_space<semaphore_mem>> -> memref<!tpu.dma_semaphore, #tpu.memory_space<semaphore_mem>>
      tpu.wait_dma2 semaphore(%120 : memref<!tpu.dma_semaphore, #tpu.memory_space<semaphore_mem>>) src(%117 : memref<1x16x128xbf16, #tpu.memory_space<any>>) dst(%118 : memref<1x16x128xbf16, #tpu.memory_space<vmem>>)
    } else {
    }
    %c1_i32_16 = arith.constant 1 : i32
    %20 = arith.cmpi slt, %arg1, %c1_i32_16 : i32
    %21 = arith.extui %20 : i1 to i32
    %c0_i32_17 = arith.constant 0 : i32
    %22 = arith.cmpi ne, %21, %c0_i32_17 : i32
    scf.if %22 {
      %c8_i32_92 = arith.constant 8 : i32
      %115 = arith.addi %0, %c8_i32_92 : i32
      %c2_i32 = arith.constant 2 : i32
      %c0_i32_93 = arith.constant 0 : i32
      %c0_i32_94 = arith.constant 0 : i32
      %116 = tpu.memref_slice %arg2[%arg0, %115, %c0_i32_93, %c0_i32_94] : memref<2x16x16x128xbf16, #tpu.memory_space<any>> -> memref<1x1x16x128xbf16, #tpu.memory_space<any>>
      %117 = tpu.memref_squeeze %116 : memref<1x1x16x128xbf16, #tpu.memory_space<any>> -> memref<1x16x128xbf16, #tpu.memory_space<any>>
      %c9_i32 = arith.constant 9 : i32
      %c0_i32_95 = arith.constant 0 : i32
      %c0_i32_96 = arith.constant 0 : i32
      %118 = tpu.memref_slice %arg7[%c9_i32, %c0_i32_95, %c0_i32_96] : memref<10x16x128xbf16, #tpu.memory_space<vmem>> -> memref<1x16x128xbf16, #tpu.memory_space<vmem>>
      %119 = tpu.memref_slice %arg9[%c2_i32] : memref<3x!tpu.dma_semaphore, #tpu.memory_space<semaphore_mem>> -> memref<1x!tpu.dma_semaphore, #tpu.memory_space<semaphore_mem>>
      %120 = tpu.memref_squeeze %119 : memref<1x!tpu.dma_semaphore, #tpu.memory_space<semaphore_mem>> -> memref<!tpu.dma_semaphore, #tpu.memory_space<semaphore_mem>>
      tpu.wait_dma2 semaphore(%120 : memref<!tpu.dma_semaphore, #tpu.memory_space<semaphore_mem>>) src(%117 : memref<1x16x128xbf16, #tpu.memory_space<any>>) dst(%118 : memref<1x16x128xbf16, #tpu.memory_space<vmem>>)
    } else {
    }
    %c0 = arith.constant 0 : index
    %c0_18 = arith.constant 0 : index
    %c0_19 = arith.constant 0 : index
    %23 = vector.load %arg7[%c0, %c0_18, %c0_19] : memref<10x16x128xbf16, #tpu.memory_space<vmem>>, vector<10x16x128xbf16>
    %24 = vector.shape_cast %23 : vector<10x16x128xbf16> to vector<160x128xbf16>
    %c0_20 = arith.constant 0 : index
    %c0_21 = arith.constant 0 : index
    %25 = vector.load %arg3[%c0_20, %c0_21] : memref<128x128xbf16, #tpu.memory_space<vmem>>, vector<128x128xbf16>
    %cst = arith.constant dense<0.000000e+00> : vector<160x128xf32>
    %26 = tpu.matmul %24, %25, %cst {dimension_numbers = #tpu.dot_dimension_numbers<[1], [0], [0], [1], [0, 0, 1, 1], [], []>} : vector<160x128xbf16>, vector<128x128xbf16>, vector<160x128xf32> -> vector<160x128xf32>
    %c0_22 = arith.constant 0 : index
    %c0_23 = arith.constant 0 : index
    %27 = vector.load %arg4[%c0_22, %c0_23] : memref<1x128xf32, #tpu.memory_space<vmem>>, vector<1x128xf32>
    %28 = vector.broadcast %27 : vector<1x128xf32> to vector<160x128xf32>
    %29 = arith.addf %26, %28 : vector<160x128xf32>
    %30 = vector.shape_cast %29 : vector<160x128xf32> to vector<10x16x128xf32>
    %c8_i32_24 = arith.constant 8 : i32
    %31 = arith.muli %arg1, %c8_i32_24 : i32
    %c1_i32_25 = arith.constant 1 : i32
    %32 = arith.subi %31, %c1_i32_25 : i32
    %33 = tpu.iota {dimensions = array<i32: 0>} : vector<10x1x1xi32>
    %34 = vector.broadcast %32 : i32 to vector<10x1x1xi32>
    %35 = arith.addi %34, %33 : vector<10x1x1xi32>
    %c0_i32_26 = arith.constant 0 : i32
    %36 = vector.broadcast %c0_i32_26 : i32 to vector<10x1x1xi32>
    %37 = arith.cmpi sge, %35, %36 : vector<10x1x1xi32>
    %c16_i32 = arith.constant 16 : i32
    %38 = vector.broadcast %c16_i32 : i32 to vector<10x1x1xi32>
    %39 = arith.cmpi slt, %35, %38 : vector<10x1x1xi32>
    %40 = arith.andi %37, %39 : vector<10x1x1xi1>
    %cst_27 = arith.constant 0.000000e+00 : f32
    %41 = vector.shape_cast %40 : vector<10x1x1xi1> to vector<10x1x1xi1>
    %42 = vector.broadcast %41 : vector<10x1x1xi1> to vector<10x16x128xi1>
    %43 = vector.broadcast %cst_27 : f32 to vector<10x16x128xf32>
    %44 = arith.select %42, %30, %43 : vector<10x16x128xi1>, vector<10x16x128xf32>
    %45 = arith.truncf %44 : vector<10x16x128xf32> to vector<10x16x128xbf16>
    %cst_28 = arith.constant 0.000000e+00 : bf16
    %46 = vector.broadcast %cst_28 : bf16 to vector<10x16x128xbf16>
    %c0_29 = arith.constant 0 : index
    %c0_30 = arith.constant 0 : index
    %c0_31 = arith.constant 0 : index
    %47 = vector.load %arg8[%c0_29, %c0_30, %c0_31] : memref<10x48x128xbf16, #tpu.memory_space<vmem>>, vector<10x16x128xbf16>
    tpu.vector_store %arg8[%c0_29, %c0_30, %c0_31], %46 {strides = array<i32>} : memref<10x48x128xbf16, #tpu.memory_space<vmem>>, vector<10x16x128xbf16>,
    %c0_32 = arith.constant 0 : index
    %c32 = arith.constant 32 : index
    %c0_33 = arith.constant 0 : index
    %48 = vector.load %arg8[%c0_32, %c32, %c0_33] : memref<10x48x128xbf16, #tpu.memory_space<vmem>>, vector<10x16x128xbf16>
    tpu.vector_store %arg8[%c0_32, %c32, %c0_33], %46 {strides = array<i32>} : memref<10x48x128xbf16, #tpu.memory_space<vmem>>, vector<10x16x128xbf16>,
    %c0_34 = arith.constant 0 : index
    %c16 = arith.constant 16 : index
    %c0_35 = arith.constant 0 : index
    %49 = vector.load %arg8[%c0_34, %c16, %c0_35] : memref<10x48x128xbf16, #tpu.memory_space<vmem>>, vector<10x16x128xbf16>
    tpu.vector_store %arg8[%c0_34, %c16, %c0_35], %45 {strides = array<i32>} : memref<10x48x128xbf16, #tpu.memory_space<vmem>>, vector<10x16x128xbf16>,
    %cst_36 = arith.constant 0.000000e+00 : f32
    %50 = vector.broadcast %cst_36 : f32 to vector<128x128xf32>
    %c0_37 = arith.constant 0 : index
    %c15 = arith.constant 15 : index
    %c0_38 = arith.constant 0 : index
    %51 = vector.load %arg8[%c0_37, %c15, %c0_38] : memref<10x48x128xbf16, #tpu.memory_space<vmem>>, vector<10x16x128xbf16>
    %52 = vector.extract_strided_slice %51 {offsets = [0, 0, 0], sizes = [8, 16, 128], strides = [1, 1, 1]} : vector<10x16x128xbf16> to vector<8x16x128xbf16>
    %53 = vector.shape_cast %52 : vector<8x16x128xbf16> to vector<128x128xbf16>
    %c0_39 = arith.constant 0 : index
    %c0_40 = arith.constant 0 : index
    %c0_41 = arith.constant 0 : index
    %c0_42 = arith.constant 0 : index
    %54 = vector.load %arg5[%c0_39, %c0_40, %c0_41, %c0_42] : memref<3x3x128x128xbf16, #tpu.memory_space<vmem>>, vector<1x1x128x128xbf16>
    %55 = vector.shape_cast %54 : vector<1x1x128x128xbf16> to vector<128x128xbf16>
    %cst_43 = arith.constant dense<0.000000e+00> : vector<128x128xf32>
    %56 = tpu.matmul %53, %55, %cst_43 {dimension_numbers = #tpu.dot_dimension_numbers<[1], [0], [0], [1], [0, 0, 1, 1], [], []>} : vector<128x128xbf16>, vector<128x128xbf16>, vector<128x128xf32> -> vector<128x128xf32>
    %57 = arith.addf %50, %56 : vector<128x128xf32>
    %58 = vector.extract_strided_slice %51 {offsets = [1, 0, 0], sizes = [8, 16, 128], strides = [1, 1, 1]} : vector<10x16x128xbf16> to vector<8x16x128xbf16>
    %59 = vector.shape_cast %58 : vector<8x16x128xbf16> to vector<128x128xbf16>
    %c1 = arith.constant 1 : index
    %c0_44 = arith.constant 0 : index
    %c0_45 = arith.constant 0 : index
    %c0_46 = arith.constant 0 : index
    %60 = vector.load %arg5[%c1, %c0_44, %c0_45, %c0_46] : memref<3x3x128x128xbf16, #tpu.memory_space<vmem>>, vector<1x1x128x128xbf16>
    %61 = vector.shape_cast %60 : vector<1x1x128x128xbf16> to vector<128x128xbf16>
    %cst_47 = arith.constant dense<0.000000e+00> : vector<128x128xf32>
    %62 = tpu.matmul %59, %61, %cst_47 {dimension_numbers = #tpu.dot_dimension_numbers<[1], [0], [0], [1], [0, 0, 1, 1], [], []>} : vector<128x128xbf16>, vector<128x128xbf16>, vector<128x128xf32> -> vector<128x128xf32>
    %63 = arith.addf %57, %62 : vector<128x128xf32>
    %64 = vector.extract_strided_slice %51 {offsets = [2, 0, 0], sizes = [8, 16, 128], strides = [1, 1, 1]} : vector<10x16x128xbf16> to vector<8x16x128xbf16>
    %65 = vector.shape_cast %64 : vector<8x16x128xbf16> to vector<128x128xbf16>
    %c2 = arith.constant 2 : index
    %c0_48 = arith.constant 0 : index
    %c0_49 = arith.constant 0 : index
    %c0_50 = arith.constant 0 : index
    %66 = vector.load %arg5[%c2, %c0_48, %c0_49, %c0_50] : memref<3x3x128x128xbf16, #tpu.memory_space<vmem>>, vector<1x1x128x128xbf16>
    %67 = vector.shape_cast %66 : vector<1x1x128x128xbf16> to vector<128x128xbf16>
    %cst_51 = arith.constant dense<0.000000e+00> : vector<128x128xf32>
    %68 = tpu.matmul %65, %67, %cst_51 {dimension_numbers = #tpu.dot_dimension_numbers<[1], [0], [0], [1], [0, 0, 1, 1], [], []>} : vector<128x128xbf16>, vector<128x128xbf16>, vector<128x128xf32> -> vector<128x128xf32>
    %69 = arith.addf %63, %68 : vector<128x128xf32>
    %c0_52 = arith.constant 0 : index
    %c16_53 = arith.constant 16 : index
    %c0_54 = arith.constant 0 : index
    %70 = vector.load %arg8[%c0_52, %c16_53, %c0_54] : memref<10x48x128xbf16, #tpu.memory_space<vmem>>, vector<10x16x128xbf16>
    %71 = vector.extract_strided_slice %70 {offsets = [0, 0, 0], sizes = [8, 16, 128], strides = [1, 1, 1]} : vector<10x16x128xbf16> to vector<8x16x128xbf16>
    %72 = vector.shape_cast %71 : vector<8x16x128xbf16> to vector<128x128xbf16>
    %c0_55 = arith.constant 0 : index
    %c1_56 = arith.constant 1 : index
    %c0_57 = arith.constant 0 : index
    %c0_58 = arith.constant 0 : index
    %73 = vector.load %arg5[%c0_55, %c1_56, %c0_57, %c0_58] : memref<3x3x128x128xbf16, #tpu.memory_space<vmem>>, vector<1x1x128x128xbf16>
    %74 = vector.shape_cast %73 : vector<1x1x128x128xbf16> to vector<128x128xbf16>
    %cst_59 = arith.constant dense<0.000000e+00> : vector<128x128xf32>
    %75 = tpu.matmul %72, %74, %cst_59 {dimension_numbers = #tpu.dot_dimension_numbers<[1], [0], [0], [1], [0, 0, 1, 1], [], []>} : vector<128x128xbf16>, vector<128x128xbf16>, vector<128x128xf32> -> vector<128x128xf32>
    %76 = arith.addf %69, %75 : vector<128x128xf32>
    %77 = vector.extract_strided_slice %70 {offsets = [1, 0, 0], sizes = [8, 16, 128], strides = [1, 1, 1]} : vector<10x16x128xbf16> to vector<8x16x128xbf16>
    %78 = vector.shape_cast %77 : vector<8x16x128xbf16> to vector<128x128xbf16>
    %c1_60 = arith.constant 1 : index
    %c1_61 = arith.constant 1 : index
    %c0_62 = arith.constant 0 : index
    %c0_63 = arith.constant 0 : index
    %79 = vector.load %arg5[%c1_60, %c1_61, %c0_62, %c0_63] : memref<3x3x128x128xbf16, #tpu.memory_space<vmem>>, vector<1x1x128x128xbf16>
    %80 = vector.shape_cast %79 : vector<1x1x128x128xbf16> to vector<128x128xbf16>
    %cst_64 = arith.constant dense<0.000000e+00> : vector<128x128xf32>
    %81 = tpu.matmul %78, %80, %cst_64 {dimension_numbers = #tpu.dot_dimension_numbers<[1], [0], [0], [1], [0, 0, 1, 1], [], []>} : vector<128x128xbf16>, vector<128x128xbf16>, vector<128x128xf32> -> vector<128x128xf32>
    %82 = arith.addf %76, %81 : vector<128x128xf32>
    %83 = vector.extract_strided_slice %70 {offsets = [2, 0, 0], sizes = [8, 16, 128], strides = [1, 1, 1]} : vector<10x16x128xbf16> to vector<8x16x128xbf16>
    %84 = vector.shape_cast %83 : vector<8x16x128xbf16> to vector<128x128xbf16>
    %c2_65 = arith.constant 2 : index
    %c1_66 = arith.constant 1 : index
    %c0_67 = arith.constant 0 : index
    %c0_68 = arith.constant 0 : index
    %85 = vector.load %arg5[%c2_65, %c1_66, %c0_67, %c0_68] : memref<3x3x128x128xbf16, #tpu.memory_space<vmem>>, vector<1x1x128x128xbf16>
    %86 = vector.shape_cast %85 : vector<1x1x128x128xbf16> to vector<128x128xbf16>
    %cst_69 = arith.constant dense<0.000000e+00> : vector<128x128xf32>
    %87 = tpu.matmul %84, %86, %cst_69 {dimension_numbers = #tpu.dot_dimension_numbers<[1], [0], [0], [1], [0, 0, 1, 1], [], []>} : vector<128x128xbf16>, vector<128x128xbf16>, vector<128x128xf32> -> vector<128x128xf32>
    %88 = arith.addf %82, %87 : vector<128x128xf32>
    %c0_70 = arith.constant 0 : index
    %c17 = arith.constant 17 : index
    %c0_71 = arith.constant 0 : index
    %89 = vector.load %arg8[%c0_70, %c17, %c0_71] : memref<10x48x128xbf16, #tpu.memory_space<vmem>>, vector<10x16x128xbf16>
    %90 = vector.extract_strided_slice %89 {offsets = [0, 0, 0], sizes = [8, 16, 128], strides = [1, 1, 1]} : vector<10x16x128xbf16> to vector<8x16x128xbf16>
    %91 = vector.shape_cast %90 : vector<8x16x128xbf16> to vector<128x128xbf16>
    %c0_72 = arith.constant 0 : index
    %c2_73 = arith.constant 2 : index
    %c0_74 = arith.constant 0 : index
    %c0_75 = arith.constant 0 : index
    %92 = vector.load %arg5[%c0_72, %c2_73, %c0_74, %c0_75] : memref<3x3x128x128xbf16, #tpu.memory_space<vmem>>, vector<1x1x128x128xbf16>
    %93 = vector.shape_cast %92 : vector<1x1x128x128xbf16> to vector<128x128xbf16>
    %cst_76 = arith.constant dense<0.000000e+00> : vector<128x128xf32>
    %94 = tpu.matmul %91, %93, %cst_76 {dimension_numbers = #tpu.dot_dimension_numbers<[1], [0], [0], [1], [0, 0, 1, 1], [], []>} : vector<128x128xbf16>, vector<128x128xbf16>, vector<128x128xf32> -> vector<128x128xf32>
    %95 = arith.addf %88, %94 : vector<128x128xf32>
    %96 = vector.extract_strided_slice %89 {offsets = [1, 0, 0], sizes = [8, 16, 128], strides = [1, 1, 1]} : vector<10x16x128xbf16> to vector<8x16x128xbf16>
    %97 = vector.shape_cast %96 : vector<8x16x128xbf16> to vector<128x128xbf16>
    %c1_77 = arith.constant 1 : index
    %c2_78 = arith.constant 2 : index
    %c0_79 = arith.constant 0 : index
    %c0_80 = arith.constant 0 : index
    %98 = vector.load %arg5[%c1_77, %c2_78, %c0_79, %c0_80] : memref<3x3x128x128xbf16, #tpu.memory_space<vmem>>, vector<1x1x128x128xbf16>
    %99 = vector.shape_cast %98 : vector<1x1x128x128xbf16> to vector<128x128xbf16>
    %cst_81 = arith.constant dense<0.000000e+00> : vector<128x128xf32>
    %100 = tpu.matmul %97, %99, %cst_81 {dimension_numbers = #tpu.dot_dimension_numbers<[1], [0], [0], [1], [0, 0, 1, 1], [], []>} : vector<128x128xbf16>, vector<128x128xbf16>, vector<128x128xf32> -> vector<128x128xf32>
    %101 = arith.addf %95, %100 : vector<128x128xf32>
    %102 = vector.extract_strided_slice %89 {offsets = [2, 0, 0], sizes = [8, 16, 128], strides = [1, 1, 1]} : vector<10x16x128xbf16> to vector<8x16x128xbf16>
    %103 = vector.shape_cast %102 : vector<8x16x128xbf16> to vector<128x128xbf16>
    %c2_82 = arith.constant 2 : index
    %c2_83 = arith.constant 2 : index
    %c0_84 = arith.constant 0 : index
    %c0_85 = arith.constant 0 : index
    %104 = vector.load %arg5[%c2_82, %c2_83, %c0_84, %c0_85] : memref<3x3x128x128xbf16, #tpu.memory_space<vmem>>, vector<1x1x128x128xbf16>
    %105 = vector.shape_cast %104 : vector<1x1x128x128xbf16> to vector<128x128xbf16>
    %cst_86 = arith.constant dense<0.000000e+00> : vector<128x128xf32>
    %106 = tpu.matmul %103, %105, %cst_86 {dimension_numbers = #tpu.dot_dimension_numbers<[1], [0], [0], [1], [0, 0, 1, 1], [], []>} : vector<128x128xbf16>, vector<128x128xbf16>, vector<128x128xf32> -> vector<128x128xf32>
    %107 = arith.addf %101, %106 : vector<128x128xf32>
    %cst_87 = arith.constant 0.000000e+00 : f32
    %108 = vector.broadcast %cst_87 : f32 to vector<128x128xf32>
    %109 = arith.maximumf %107, %108 : vector<128x128xf32>
    %110 = vector.shape_cast %109 : vector<128x128xf32> to vector<8x16x128xf32>
    %111 = arith.truncf %110 : vector<8x16x128xf32> to vector<8x16x128xbf16>
    %c0_88 = arith.constant 0 : index
    %c0_89 = arith.constant 0 : index
    %c0_90 = arith.constant 0 : index
    %c0_91 = arith.constant 0 : index
    %112 = vector.load %arg6[%c0_88, %c0_89, %c0_90, %c0_91] : memref<1x8x16x128xbf16, #tpu.memory_space<vmem>>, vector<1x8x16x128xbf16>
    %113 = vector.shape_cast %112 : vector<1x8x16x128xbf16> to vector<8x16x128xbf16>
    %114 = vector.shape_cast %111 : vector<8x16x128xbf16> to vector<1x8x16x128xbf16>
    tpu.vector_store %arg6[%c0_88, %c0_89, %c0_90, %c0_91], %114 {strides = array<i32>} : memref<1x8x16x128xbf16, #tpu.memory_space<vmem>>, vector<1x8x16x128xbf16>,
    return
  }
  func.func @transform_1(%arg0: i32, %arg1: i32) -> (i32, i32) {
    %c0_i32 = arith.constant 0 : i32
    %c0_i32_0 = arith.constant 0 : i32
    %c0_i32_1 = arith.constant 0 : i32
    return %c0_i32, %c0_i32_0 : i32, i32
  }
  func.func @transform_2(%arg0: i32, %arg1: i32) -> (i32, i32) {
    %c0_i32 = arith.constant 0 : i32
    %c0_i32_0 = arith.constant 0 : i32
    %c0_i32_1 = arith.constant 0 : i32
    return %c0_i32, %c0_i32_0 : i32, i32
  }
  func.func @transform_3(%arg0: i32, %arg1: i32) -> (i32, i32, i32, i32) {
    %c0_i32 = arith.constant 0 : i32
    %c0_i32_0 = arith.constant 0 : i32
    %c0_i32_1 = arith.constant 0 : i32
    %c0_i32_2 = arith.constant 0 : i32
    %c0_i32_3 = arith.constant 0 : i32
    return %c0_i32, %c0_i32_0, %c0_i32_1, %c0_i32_2 : i32, i32, i32, i32
  }
  func.func @transform_4(%arg0: i32, %arg1: i32) -> (i32, i32, i32, i32) {
    %c0_i32 = arith.constant 0 : i32
    %c0_i32_0 = arith.constant 0 : i32
    %c0_i32_1 = arith.constant 0 : i32
    return %arg0, %arg1, %c0_i32, %c0_i32_0 : i32, i32, i32, i32
  }
}

</mosaic_0001>

<llo_original>
// kernel: tpu_custom_call.1
$region0: #{tpu_custom_call.1}
  #allocation0 [shape = 'u32[]', space=smem, size = 0x4, offset = 0x4, fixed_abs, tag = 'smem constant byte address 0x4 - core index']
  #allocation1 [shape = 'u32[144,128]{1,0:T(1,128)}', space=vmem, size = 0x12000, scoped, tag = 'internal scratch']
  #allocation2 [shape = 'bf16[10,16,128]{2,1,0:T(16,128)(2,1)}', space=vmem, size = 0xa000, scoped, tag = 'scratch operand']
  #allocation3 [shape = 'bf16[10,48,128]{2,1,0:T(16,128)(2,1)}', space=vmem, size = 0x1e000, scoped, tag = 'scratch operand']
  #allocation4 [shape = 's32[3]{0}', space=sflag, size = 0xc, scoped, tag = 'scratch operand']
  #allocation11 [shape = 's32[]', space=sflag, size = 0x4, offset = 0, fixed_abs, tag = 'sflag constant byte address 0x0 - dummy sync flag']
  #allocation12 [shape = 's32[]', space=sflag, size = 0x4, offset = 0, fixed_abs, tag = 'sflag constant byte address 0x0 - dummy sync flag']
  #allocation13 [shape = 'u32[]', space=smem, size = 0x4, offset = 0x44, fixed_abs, tag = 'smem constant byte address 0x44 - assertion arg 0']
  #allocation14 [shape = 'u32[]', space=smem, size = 0x4, offset = 0x48, fixed_abs, tag = 'smem constant byte address 0x48 - assertion arg 1']
  #allocation15 [shape = 's32[]', space=sflag, size = 0x4, offset = 0, fixed_abs, tag = 'sflag constant byte address 0x0 - dummy sync flag']
  #allocation16 [shape = 's32[]', space=sflag, size = 0x4, offset = 0, fixed_abs, tag = 'sflag constant byte address 0x0 - dummy sync flag']
  #allocation17 [shape = 's32[]', space=sflag, size = 0x4, offset = 0, fixed_abs, tag = 'sflag constant byte address 0x0 - dummy sync flag']
  #allocation18 [shape = 's32[]', space=sflag, size = 0x4, offset = 0, fixed_abs, tag = 'sflag constant byte address 0x0 - dummy sync flag']
  %s0 = inlined_call_operand.hbm [shape: bf16[2,16,16,128], index: 0, kind: input, shape index: {}]
  %s1 = inlined_call_operand.hbm [shape: bf16[128,128], index: 1, kind: input, shape index: {}]
  %s2 = inlined_call_operand.vmem [shape: f32[1,128], index: 2, kind: input, shape index: {}]
  %s3 = inlined_call_operand.hbm [shape: bf16[3,3,128,128], index: 3, kind: input, shape index: {}]
  %s4 = inlined_call_operand.hbm [shape: bf16[2,16,16,128], index: 4, kind: output, shape index: {}]
  %s5 = sld [smem:[#allocation0]]
  $region81: #{tpu_custom_call.1} parent=0
    _
  %s7 = ssub.s32 1, %s5
  %s8 = scalar_select 0, %s7, %s5
  $region1: #{tpu_custom_call.1} parent=0
    #allocation5 [shape = 'u8[32768]{0}', space=vmem, size = 0x8000, scoped, tag = 'input window, operand 1, single buffered']
    #allocation6 [shape = 's32[2]{0}', space=sflag, size = 0x8, scoped, tag = 'scoped memory for tpu_custom_call.1']
    #allocation7 [shape = 's32[2]{0}', space=sflag, size = 0x8, scoped, tag = 'scoped memory for tpu_custom_call.1']
    #allocation8 [shape = 'u8[294912]{0}', space=vmem, size = 0x48000, scoped, tag = 'input window, operand 3, single buffered']
    #allocation9 [shape = 's32[1]{0}', space=sflag, size = 0x4, scoped, tag = 'scoped memory for tpu_custom_call.1']
    #allocation10 [shape = 'u8[65536]{0}', space=vmem, size = 0x10000, scoped, tag = 'output window, operand 0']
    %9 = vsyncpa [#allocation6], 0
    %10 = vsyncpa [#allocation9], 0
    %11 = vsyncpa [#allocation7], 0
    %s12 = scalar_lea.sflag [#allocation7], 1
    %13 = vsyncpa %s12, 0
    loop: start=0, step=1, limit=6
    $region2: #{tpu_custom_call.1} parent=1 // loop_pre_header
      _
    $region3: #{tpu_custom_call.1} parent=1 // loop_header
      %s15 = sphi 0, %s19
      %p16 = scmp.ge.s32.totalorder %s15, 6
      %s22 = sphi 0, %s34
      %s23 = sphi 0, %s30
      %s24 = sphi 0, %s22
      %s25 = sphi 0, %s23
      %s26 = sphi 0, %s24
      %s27 = sphi 0, %s25
      %s35 = sphi 0, %s35
      %s37 = sphi 0, %s35
      %s38 = sphi 0, %s37
      %s52 = sphi 0, %s38
      %s56 = sphi 0, %s56
      %s58 = sphi 0, %s56
      %s59 = sphi 0, %s58
      %s73 = sphi 0, %s59
      %s77 = sphi 0, %s77
      %s79 = sphi 0, %s77
      %s80 = sphi 0, %s79
      %s94 = sphi 0, %s80
      %s102 = sphi 0, %s104
      %s105 = sphi 0, %s102
      %s106 = sphi 0, %s105
      %s122 = sphi 0, %s106
    $region4: #{tpu_custom_call.1} parent=1 // loop_header_branch
      %18 = sbr.rel (%p16) target = $region8
    $region5: #{tpu_custom_call.1} parent=1 // loop_body
      %s20 = ssub.s32 %s15, 1
      %s21 = ssub.s32 %s15, 2
      %s28 = sadd.s32 1, %s23
      %p29 = scmp.ge.s32.totalorder %s28, 2
      %s30 = scalar_select %p29, 0, %s28
      %s31 = sadd.s32 1, %s22
      %s32 = scalar_select %p29, %s31, %s22
      %p33 = scmp.ge.s32.totalorder %s32, 2
      %s34 = scalar_select %p33, 0, %s32
      %s36 = sadd.s32 %s35, 1
      %p39 = scmp.eq.s32.totalorder %s15, 3
      %p40 = scmp.ne.s32.totalorder %s35, %s37
      %p41 = scmp.eq.s32.totalorder %s15, 0
      %p42 = por %p40, %p41
      %p43 = scmp.ne.s32.totalorder %s35, %s37
      %p44 = scmp.eq.s32.totalorder %s20, 3
      %p45 = por %p43, %p44
      %p46 = scmp.ne.s32.totalorder %s37, %s38
      %p47 = scmp.eq.s32.totalorder %s20, 0
      %p48 = por %p46, %p47
      %p49 = scmp.ne.s32.totalorder %s37, %s38
      %p50 = scmp.eq.s32.totalorder %s21, 3
      %p51 = por %p49, %p50
      %p53 = scmp.ne.s32.totalorder %s38, %s52
      %p54 = scmp.eq.s32.totalorder %s21, 0
      %p55 = por %p53, %p54
      %s57 = sadd.s32 %s56, 1
      %p60 = scmp.eq.s32.totalorder %s15, 3
      %p61 = scmp.ne.s32.totalorder %s56, %s58
      %p62 = scmp.eq.s32.totalorder %s15, 0
      %p63 = por %p61, %p62
      %p64 = scmp.ne.s32.totalorder %s56, %s58
      %p65 = scmp.eq.s32.totalorder %s20, 3
      %p66 = por %p64, %p65
      %p67 = scmp.ne.s32.totalorder %s58, %s59
      %p68 = scmp.eq.s32.totalorder %s20, 0
      %p69 = por %p67, %p68
      %p70 = scmp.ne.s32.totalorder %s58, %s59
      %p71 = scmp.eq.s32.totalorder %s21, 3
      %p72 = por %p70, %p71
      %p74 = scmp.ne.s32.totalorder %s59, %s73
      %p75 = scmp.eq.s32.totalorder %s21, 0
      %p76 = por %p74, %p75
      %s78 = sadd.s32 %s77, 1
      %p81 = scmp.eq.s32.totalorder %s15, 3
      %p82 = scmp.ne.s32.totalorder %s77, %s79
      %p83 = scmp.eq.s32.totalorder %s15, 0
      %p84 = por %p82, %p83
      %p85 = scmp.ne.s32.totalorder %s77, %s79
      %p86 = scmp.eq.s32.totalorder %s20, 3
      %p87 = por %p85, %p86
      %p88 = scmp.ne.s32.totalorder %s79, %s80
      %p89 = scmp.eq.s32.totalorder %s20, 0
      %p90 = por %p88, %p89
      %p91 = scmp.ne.s32.totalorder %s79, %s80
      %p92 = scmp.eq.s32.totalorder %s21, 3
      %p93 = por %p91, %p92
      %p95 = scmp.ne.s32.totalorder %s80, %s94
      %p96 = scmp.eq.s32.totalorder %s21, 0
      %p97 = por %p95, %p96
      %s98 = ssub.s32 %s22, %s34
      %s99 = ssub.s32 %s23, %s30
      %s100 = sor.u32 %s98, %s99
      %p101 = scmp.eq.s32.totalorder %s100, 0
      %s103 = sadd.s32 %s102, 1
      %s104 = scalar_select %p101, %s102, %s103
      %p107 = pneg %p101
      %p108 = scmp.eq.s32.totalorder %s15, 3
      %p109 = por %p107, %p108
      %p110 = scmp.ne.s32.totalorder %s102, %s105
      %p111 = scmp.eq.s32.totalorder %s15, 0
      %p112 = por %p110, %p111
      %p113 = scmp.ne.s32.totalorder %s102, %s105
      %p114 = scmp.eq.s32.totalorder %s20, 3
      %p115 = por %p113, %p114
      %p116 = scmp.ne.s32.totalorder %s105, %s106
      %p117 = scmp.eq.s32.totalorder %s20, 0
      %p118 = por %p116, %p117
      %p119 = scmp.ne.s32.totalorder %s105, %s106
      %p120 = scmp.eq.s32.totalorder %s21, 3
      %p121 = por %p119, %p120
      %p123 = scmp.ne.s32.totalorder %s106, %s122
      %p124 = scmp.eq.s32.totalorder %s21, 0
      %p125 = por %p123, %p124
      %p126 = scmp.le.s32.totalorder 1, %s15
      %p127 = scmp.lt.s32.totalorder %s15, 5
      %p128 = pnand %p126, %p127
      %p129 = pneg %p128
      // Predicated region
      $region9: #{tpu_custom_call.1} parent=5 // pred_check
        _
      $region10: #{tpu_custom_call.1} parent=5 // pred_check_branch
        %131 = sbr.rel (%p128) target = $region12
      $region11: #{tpu_custom_call.1} parent=5 // pred_region
        %s132 = ssub.s32 %s15, 1
        // Predicated region
        $region13: #{tpu_custom_call.1} parent=11 // pred_check
          %p133 = pneg %p48
        $region14: #{tpu_custom_call.1} parent=11 // pred_check_branch
          %135 = sbr.rel (%p133) target = $region16
        $region15: #{tpu_custom_call.1} parent=11 // pred_region
          %s137 = ssub.s32 1024, 1024
          %138 = vsyncadd [#allocation6], %s137
          %s139 = sshll.u32 [#allocation5], 4
          %s140 = int_to_ptr.vmem [resolvable:$true] %s139
          %145 = dma.hbm_to_vmem [thread:$0]  %s1, 1024, %s140, [#allocation6], 64, 64, 4
        $region16: #{tpu_custom_call.1} parent=11 // pred_fallthru
          _
        // Predicated region
        $region17: #{tpu_custom_call.1} parent=11 // pred_check
          %p146 = pneg %p69
        $region18: #{tpu_custom_call.1} parent=11 // pred_check_branch
          %148 = sbr.rel (%p146) target = $region20
        $region19: #{tpu_custom_call.1} parent=11 // pred_region
          _
        $region20: #{tpu_custom_call.1} parent=11 // pred_fallthru
          _
        // Predicated region
        $region21: #{tpu_custom_call.1} parent=11 // pred_check
          %p149 = pneg %p90
        $region22: #{tpu_custom_call.1} parent=11 // pred_check_branch
          %151 = sbr.rel (%p149) target = $region24
        $region23: #{tpu_custom_call.1} parent=11 // pred_region
          %s153 = ssub.s32 9216, 9216
          %154 = vsyncadd [#allocation9], %s153
          %s155 = sshll.u32 [#allocation8], 4
          %s156 = int_to_ptr.vmem [resolvable:$true] %s155
          %161 = dma.hbm_to_vmem [thread:$0]  %s3, 9216, %s156, [#allocation9], 64, 64, 4
        $region24: #{tpu_custom_call.1} parent=11 // pred_fallthru
          _
      $region12: #{tpu_custom_call.1} parent=5 // pred_fallthru
        _
      %p162 = scmp.lt.s32.totalorder %s15, 4
      // Predicated region
      $region25: #{tpu_custom_call.1} parent=5 // pred_check
        %p163 = pneg %p162
      $region26: #{tpu_custom_call.1} parent=5 // pred_check_branch
        %165 = sbr.rel (%p163) target = $region28
      $region27: #{tpu_custom_call.1} parent=5 // pred_region
        _
      $region28: #{tpu_custom_call.1} parent=5 // pred_fallthru
        _
      %p166 = scmp.le.s32.totalorder 1, %s15
      %p167 = scmp.lt.s32.totalorder %s15, 5
      %p168 = pnand %p166, %p167
      %p169 = pneg %p168
      // Predicated region
      $region29: #{tpu_custom_call.1} parent=5 // pred_check
        _
      $region30: #{tpu_custom_call.1} parent=5 // pred_check_branch
        %171 = sbr.rel (%p168) target = $region32
      $region31: #{tpu_custom_call.1} parent=5 // pred_region
        %s172 = ssub.s32 %s15, 1
        // Predicated region
        $region33: #{tpu_custom_call.1} parent=31 // pred_check
          %p173 = pneg %p48
        $region34: #{tpu_custom_call.1} parent=31 // pred_check_branch
          %175 = sbr.rel (%p173) target = $region36
        $region35: #{tpu_custom_call.1} parent=31 // pred_region
          %176 = dma.done [#allocation6], 1024
        $region36: #{tpu_custom_call.1} parent=31 // pred_fallthru
          _
        // Predicated region
        $region37: #{tpu_custom_call.1} parent=31 // pred_check
          %p177 = pneg %p90
        $region38: #{tpu_custom_call.1} parent=31 // pred_check_branch
          %179 = sbr.rel (%p177) target = $region40
        $region39: #{tpu_custom_call.1} parent=31 // pred_region
          %180 = dma.done [#allocation9], 9216
        $region40: #{tpu_custom_call.1} parent=31 // pred_fallthru
          _
        %p181 = pneg %p48
        %p182 = pneg %p45
        %p183 = pneg %p69
        %p184 = pneg %p66
        %p185 = pneg %p90
        %p186 = pneg %p87
        %p187 = pneg %p118
        %p188 = pneg %p115
        %s189 = sand.u32 %s105, 1
        %s190 = scalar_lea.sflag [#allocation7], %s189
        %s191 = sand.u32 %s105, 1
        %s192 = smul.addr %s191, 64
        %s193 = scalar_lea.vmem [#allocation10], %s192
        %s194 = smul.u32 8, %s25
        %s196 = smul.u32 %s25, 8
        %s197 = smul.u32 %s196, 2
        %s198 = smul.u32 %s24, 32
        %s199 = sadd.s32 %s197, %s198
        %s200 = smul.addr %s199, 64
        %s201 = scalar_lea.hbm %s0, %s200
        %s202 = scalar_lea.vmem [#allocation2], 8
        // Predicated region
        $region41: #{tpu_custom_call.1} parent=31 // pred_check
          _
        $region42: #{tpu_custom_call.1} parent=31 // pred_check_branch
          %204 = sbr.rel target = $region44
        $region43: #{tpu_custom_call.1} parent=31 // pred_region
          %205 = sst [smem:[#allocation13]] [#allocation12]
          %206 = sst [smem:[#allocation14]] [#allocation11]
        $region44: #{tpu_custom_call.1} parent=31 // pred_fallthru
          _
        %208 = shalt.err (0)
        %s210 = sshll.u32 %s202, 4
        %s211 = int_to_ptr.vmem [resolvable:$true] %s210
        %213 = dma.hbm_to_vmem [thread:$0]  %s201, 1024, %s211, [#allocation4]
        %p214 = scmp.gt.s32.totalorder %s25, 0
        // Predicated region
        $region45: #{tpu_custom_call.1} parent=31 // pred_check
          %p215 = pneg %p214
        $region46: #{tpu_custom_call.1} parent=31 // pred_check_branch
          %217 = sbr.rel (%p215) target = $region48
        $region47: #{tpu_custom_call.1} parent=31 // pred_region
          %s218 = ssub.s32 %s196, 1
          %s219 = smul.u32 %s218, 2
          %s220 = sadd.s32 %s219, %s198
          %s221 = smul.addr %s220, 64
          %s222 = scalar_lea.hbm %s0, %s221
          %s223 = scalar_lea.sflag [#allocation4], 1
          // Predicated region
          $region49: #{tpu_custom_call.1} parent=47 // pred_check
            _
          $region50: #{tpu_custom_call.1} parent=47 // pred_check_branch
            %225 = sbr.rel target = $region52
          $region51: #{tpu_custom_call.1} parent=47 // pred_region
            %226 = sst [smem:[#allocation13]] [#allocation16]
            %227 = sst [smem:[#allocation14]] [#allocation15]
          $region52: #{tpu_custom_call.1} parent=47 // pred_fallthru
            _
          %229 = shalt.err (0)
          %s231 = sshll.u32 [#allocation2], 4
          %s232 = int_to_ptr.vmem [resolvable:$true] %s231
          %234 = dma.hbm_to_vmem [thread:$0]  %s222, 128, %s232, %s223
        $region48: #{tpu_custom_call.1} parent=31 // pred_fallthru
          _
        %p235 = scmp.lt.s32.totalorder %s25, 1
        // Predicated region
        $region53: #{tpu_custom_call.1} parent=31 // pred_check
          %p236 = pneg %p235
        $region54: #{tpu_custom_call.1} parent=31 // pred_check_branch
          %238 = sbr.rel (%p236) target = $region56
        $region55: #{tpu_custom_call.1} parent=31 // pred_region
          %s239 = sadd.s32 %s196, 8
          %s240 = smul.u32 %s239, 2
          %s241 = sadd.s32 %s240, %s198
          %s242 = smul.addr %s241, 64
          %s243 = scalar_lea.hbm %s0, %s242
          %s244 = scalar_lea.vmem [#allocation2], 72
          %s245 = scalar_lea.sflag [#allocation4], 2
          // Predicated region
          $region57: #{tpu_custom_call.1} parent=55 // pred_check
            _
          $region58: #{tpu_custom_call.1} parent=55 // pred_check_branch
            %247 = sbr.rel target = $region60
          $region59: #{tpu_custom_call.1} parent=55 // pred_region
            %248 = sst [smem:[#allocation13]] [#allocation18]
            %249 = sst [smem:[#allocation14]] [#allocation17]
          $region60: #{tpu_custom_call.1} parent=55 // pred_fallthru
            _
          %251 = shalt.err (0)
          %s253 = sshll.u32 %s244, 4
          %s254 = int_to_ptr.vmem [resolvable:$true] %s253
          %256 = dma.hbm_to_vmem [thread:$0]  %s243, 128, %s254, %s245
        $region56: #{tpu_custom_call.1} parent=31 // pred_fallthru
          _
        %s257 = smul.u32 4, 8
        %s258 = smul.u32 %s257, 2
        %s259 = smul.u32 %s258, 1
        %s260 = sshll.u32 %s259, 4
        %261 = dma.done [#allocation4], %s260
        // Predicated region
        $region61: #{tpu_custom_call.1} parent=31 // pred_check
          %p262 = pneg %p214
        $region62: #{tpu_custom_call.1} parent=31 // pred_check_branch
          %264 = sbr.rel (%p262) target = $region64
        $region63: #{tpu_custom_call.1} parent=31 // pred_region
          %s265 = scalar_lea.sflag [#allocation4], 1
          %s266 = smul.u32 4, 1
          %s267 = smul.u32 %s266, 2
          %s268 = smul.u32 %s267, 1
          %s269 = sshll.u32 %s268, 4
          %270 = dma.done %s265, %s269
        $region64: #{tpu_custom_call.1} parent=31 // pred_fallthru
          _
        // Predicated region
        $region65: #{tpu_custom_call.1} parent=31 // pred_check
          %p271 = pneg %p235
        $region66: #{tpu_custom_call.1} parent=31 // pred_check_branch
          %273 = sbr.rel (%p271) target = $region68
        $region67: #{tpu_custom_call.1} parent=31 // pred_region
          %s274 = scalar_lea.sflag [#allocation4], 2
          %s275 = smul.u32 4, 1
          %s276 = smul.u32 %s275, 2
          %s277 = smul.u32 %s276, 1
          %s278 = sshll.u32 %s277, 4
          %279 = dma.done %s274, %s278
        $region68: #{tpu_custom_call.1} parent=31 // pred_fallthru
          _
        %v280 = vld [vmem:[#allocation2] sm:$0xff]
        %v281 = vld [vmem:[#allocation2 + $0x8] sm:$0xff]
        %v282 = vld [vmem:[#allocation2 + $0x10] sm:$0xff]
        %v283 = vld [vmem:[#allocation2 + $0x18] sm:$0xff]
        %v284 = vld [vmem:[#allocation2 + $0x20] sm:$0xff]
        %v285 = vld [vmem:[#allocation2 + $0x28] sm:$0xff]
        %v286 = vld [vmem:[#allocation2 + $0x30] sm:$0xff]
        %v287 = vld [vmem:[#allocation2 + $0x38] sm:$0xff]
        %v288 = vld [vmem:[#allocation2 + $0x40] sm:$0xff]
        %v289 = vld [vmem:[#allocation2 + $0x48] sm:$0xff]
        %v290 = vld [vmem:[#allocation5] sm:$0xf]
        %v291 = vld [vmem:[#allocation5 + $0x4] sm:$0xf]
        %v292 = vld [vmem:[#allocation5 + $0x8] sm:$0xf]
        %v293 = vld [vmem:[#allocation5 + $0xc] sm:$0xf]
        %v294 = vld [vmem:[#allocation5 + $0x10] sm:$0xf]
        %v295 = vld [vmem:[#allocation5 + $0x14] sm:$0xf]
        %v296 = vld [vmem:[#allocation5 + $0x18] sm:$0xf]
        %v297 = vld [vmem:[#allocation5 + $0x1c] sm:$0xf]
        %v298 = vld [vmem:[#allocation5 + $0x20] sm:$0xf]
        %v299 = vld [vmem:[#allocation5 + $0x24] sm:$0xf]
        %v300 = vld [vmem:[#allocation5 + $0x28] sm:$0xf]
        %v301 = vld [vmem:[#allocation5 + $0x2c] sm:$0xf]
        %v302 = vld [vmem:[#allocation5 + $0x30] sm:$0xf]
        %v303 = vld [vmem:[#allocation5 + $0x34] sm:$0xf]
        %v304 = vld [vmem:[#allocation5 + $0x38] sm:$0xf]
        %v305 = vld [vmem:[#allocation5 + $0x3c] sm:$0xf]
        %v306 = vld [vmem:[%s2] sm:$0x1]
        %v308 = vlaneseq
        %v309 = vshrl.u32 %v308, 7
        %v310 = vsub.s32 0, %v309
        %v311 = vrot.slane %v306, %v310
        %v329 = vunpack.c.l.b16 %v290
        %v330 = vunpack.c.l.b16 %v291
        %v331 = vunpack.c.l.b16 %v292
        %v332 = vunpack.c.l.b16 %v293
        %v333 = vunpack.c.l.b16 %v294
        %v334 = vunpack.c.l.b16 %v295
        %v335 = vunpack.c.l.b16 %v296
        %v336 = vunpack.c.l.b16 %v297
        %v337 = vunpack.c.l.b16 %v298
        %v338 = vunpack.c.l.b16 %v299
        %v339 = vunpack.c.l.b16 %v300
        %v340 = vunpack.c.l.b16 %v301
        %v341 = vunpack.c.l.b16 %v302
        %v342 = vunpack.c.l.b16 %v303
        %v343 = vunpack.c.l.b16 %v304
        %v344 = vunpack.c.l.b16 %v305
        %v345 = vpack.c.b16 %v330, %v329
        %v346 = vpack.c.b16 %v332, %v331
        %v347 = vpack.c.b16 %v334, %v333
        %v348 = vpack.c.b16 %v336, %v335
        %v349 = vpack.c.b16 %v338, %v337
        %v350 = vpack.c.b16 %v340, %v339
        %v351 = vpack.c.b16 %v342, %v341
        %v352 = vpack.c.b16 %v344, %v343
        %361 = vmatprep.subr.bf16.mxu0 0
        %362 = vmatpush1.bf16.msra.mxu0 %v345
        %363 = vmatprep.subr.bf16.mxu0 0
        %364 = vmatpush1.bf16.msra.mxu0 %v346
        %365 = vmatprep.subr.bf16.mxu0 0
        %366 = vmatpush1.bf16.msra.mxu0 %v347
        %367 = vmatprep.subr.bf16.mxu0 0
        %368 = vmatpush1.bf16.msra.mxu0 %v348
        %369 = vmatprep.subr.bf16.mxu0 0
        %370 = vmatpush1.bf16.msra.mxu0 %v349
        %371 = vmatprep.subr.bf16.mxu0 0
        %372 = vmatpush1.bf16.msra.mxu0 %v350
        %373 = vmatprep.subr.bf16.mxu0 0
        %374 = vmatpush1.bf16.msra.mxu0 %v351
        %375 = vmatprep.subr.bf16.mxu0 0
        %376 = vmatpush1.bf16.msra.mxu0 %v352
        %377 = vmatprep.subr.bf16.mxu0 0
        %378 = vmatpush1.bf16.msra.mxu0 0
        %379 = vmatprep.subr.bf16.mxu0 0
        %380 = vmatpush1.bf16.msra.mxu0 0
        %381 = vmatprep.subr.bf16.mxu0 0
        %382 = vmatpush1.bf16.msra.mxu0 0
        %383 = vmatprep.subr.bf16.mxu0 0
        %384 = vmatpush1.bf16.msra.mxu0 0
        %385 = vmatprep.subr.bf16.mxu0 0
        %386 = vmatpush1.bf16.msra.mxu0 0
        %387 = vmatprep.subr.bf16.mxu0 0
        %388 = vmatpush1.bf16.msra.mxu0 0
        %389 = vmatprep.subr.bf16.mxu0 0
        %390 = vmatpush1.bf16.msra.mxu0 0
        %391 = vmatprep.subr.bf16.mxu0 0
        %392 = vmatpush1.bf16.msra.mxu0 0
        %393 = vmatprep.mubr.bf16.mxu0 0
        %394 = vmatmul.mubr.bf16.gmra.mrb[0].mxu0 %v280
        %v395 = vpop.f32.mrb[0].mxu0
        %v396 = vadd.f32 %v311, %v395
        %v397 = vpop.f32.mrb[0].mxu0
        %v398 = vpop.f32.mrb[0].mxu0
        %v399 = vadd.f32 %v311, %v398
        %v400 = vpop.f32.mrb[0].mxu0
        %401 = vmatprep.mubr.bf16.mxu0 0
        %402 = vmatmul.mubr.bf16.gmra.mrb[0].mxu0 %v281
        %v403 = vpop.f32.mrb[0].mxu0
        %v404 = vadd.f32 %v311, %v403
        %v405 = vpop.f32.mrb[0].mxu0
        %v406 = vpop.f32.mrb[0].mxu0
        %v407 = vadd.f32 %v311, %v406
        %v408 = vpop.f32.mrb[0].mxu0
        %409 = vmatprep.mubr.bf16.mxu0 0
        %410 = vmatmul.mubr.bf16.gmra.mrb[0].mxu0 %v282
        %v411 = vpop.f32.mrb[0].mxu0
        %v412 = vadd.f32 %v311, %v411
        %v413 = vpop.f32.mrb[0].mxu0
        %v414 = vpop.f32.mrb[0].mxu0
        %v415 = vadd.f32 %v311, %v414
        %v416 = vpop.f32.mrb[0].mxu0
        %417 = vmatprep.mubr.bf16.mxu0 0
        %418 = vmatmul.mubr.bf16.gmra.mrb[0].mxu0 %v283
        %v419 = vpop.f32.mrb[0].mxu0
        %v420 = vadd.f32 %v311, %v419
        %v421 = vpop.f32.mrb[0].mxu0
        %v422 = vpop.f32.mrb[0].mxu0
        %v423 = vadd.f32 %v311, %v422
        %v424 = vpop.f32.mrb[0].mxu0
        %425 = vmatprep.mubr.bf16.mxu0 0
        %426 = vmatmul.mubr.bf16.gmra.mrb[0].mxu0 %v284
        %v427 = vpop.f32.mrb[0].mxu0
        %v428 = vadd.f32 %v311, %v427
        %v429 = vpop.f32.mrb[0].mxu0
        %v430 = vpop.f32.mrb[0].mxu0
        %v431 = vadd.f32 %v311, %v430
        %v432 = vpop.f32.mrb[0].mxu0
        %433 = vmatprep.mubr.bf16.mxu0 0
        %434 = vmatmul.mubr.bf16.gmra.mrb[0].mxu0 %v285
        %v435 = vpop.f32.mrb[0].mxu0
        %v436 = vadd.f32 %v311, %v435
        %v437 = vpop.f32.mrb[0].mxu0
        %v438 = vpop.f32.mrb[0].mxu0
        %v439 = vadd.f32 %v311, %v438
        %v440 = vpop.f32.mrb[0].mxu0
        %441 = vmatprep.mubr.bf16.mxu0 0
        %442 = vmatmul.mubr.bf16.gmra.mrb[0].mxu0 %v286
        %v443 = vpop.f32.mrb[0].mxu0
        %v444 = vadd.f32 %v311, %v443
        %v445 = vpop.f32.mrb[0].mxu0
        %v446 = vpop.f32.mrb[0].mxu0
        %v447 = vadd.f32 %v311, %v446
        %v448 = vpop.f32.mrb[0].mxu0
        %449 = vmatprep.mubr.bf16.mxu0 0
        %450 = vmatmul.mubr.bf16.gmra.mrb[0].mxu0 %v287
        %v451 = vpop.f32.mrb[0].mxu0
        %v452 = vadd.f32 %v311, %v451
        %v453 = vpop.f32.mrb[0].mxu0
        %v454 = vpop.f32.mrb[0].mxu0
        %v455 = vadd.f32 %v311, %v454
        %v456 = vpop.f32.mrb[0].mxu0
        %457 = vmatprep.mubr.bf16.mxu0 0
        %458 = vmatmul.mubr.bf16.gmra.mrb[0].mxu0 %v288
        %v459 = vpop.f32.mrb[0].mxu0
        %v460 = vadd.f32 %v311, %v459
        %v461 = vpop.f32.mrb[0].mxu0
        %v462 = vpop.f32.mrb[0].mxu0
        %v463 = vadd.f32 %v311, %v462
        %v464 = vpop.f32.mrb[0].mxu0
        %465 = vmatprep.mubr.bf16.mxu0 0
        %466 = vmatmul.mubr.bf16.gmra.mrb[0].mxu0 %v289
        %v467 = vpop.f32.mrb[0].mxu0
        %v468 = vadd.f32 %v311, %v467
        %v469 = vpop.f32.mrb[0].mxu0
        %v470 = vpop.f32.mrb[0].mxu0
        %v471 = vadd.f32 %v311, %v470
        %v472 = vpop.f32.mrb[0].mxu0
        %473 = vdwg.mxu0
        %s474 = ssub.s32 %s196, 1
        %v475 = vstv %s474
        %v476 = vadd.s32 %v475, 1
        %v477 = vadd.s32 %v475, 2
        %v478 = vadd.s32 %v475, 3
        %v479 = vadd.s32 %v475, 4
        %v480 = vadd.s32 %v475, 5
        %v481 = vadd.s32 %v475, 6
        %v482 = vadd.s32 %v475, 7
        %v483 = vadd.s32 %v475, 8
        %v484 = vadd.s32 %v475, 9
        %vm485 = vcmp.ge.s32.totalorder %v475, 0
        %vm486 = vcmp.ge.s32.totalorder %v476, 0
        %vm487 = vcmp.ge.s32.totalorder %v477, 0
        %vm488 = vcmp.ge.s32.totalorder %v478, 0
        %vm489 = vcmp.ge.s32.totalorder %v479, 0
        %vm490 = vcmp.ge.s32.totalorder %v480, 0
        %vm491 = vcmp.ge.s32.totalorder %v481, 0
        %vm492 = vcmp.ge.s32.totalorder %v482, 0
        %vm493 = vcmp.ge.s32.totalorder %v483, 0
        %vm494 = vcmp.ge.s32.totalorder %v484, 0
        %vm495 = vcmp.lt.s32.totalorder %v475, 16
        %vm496 = vcmp.lt.s32.totalorder %v476, 16
        %vm497 = vcmp.lt.s32.totalorder %v477, 16
        %vm498 = vcmp.lt.s32.totalorder %v478, 16
        %vm499 = vcmp.lt.s32.totalorder %v479, 16
        %vm500 = vcmp.lt.s32.totalorder %v480, 16
        %vm501 = vcmp.lt.s32.totalorder %v481, 16
        %vm502 = vcmp.lt.s32.totalorder %v482, 16
        %vm503 = vcmp.lt.s32.totalorder %v483, 16
        %vm504 = vcmp.lt.s32.totalorder %v484, 16
        %vm505 = vmand %vm485, %vm495
        %vm506 = vmand %vm486, %vm496
        %vm507 = vmand %vm487, %vm497
        %vm508 = vmand %vm488, %vm498
        %vm509 = vmand %vm489, %vm499
        %vm510 = vmand %vm490, %vm500
        %vm511 = vmand %vm491, %vm501
        %vm512 = vmand %vm492, %vm502
        %vm513 = vmand %vm493, %vm503
        %vm514 = vmand %vm494, %vm504
        %v515 = vsel %vm505, 1, 0
        %v516 = vsel %vm506, 1, 0
        %v517 = vsel %vm507, 1, 0
        %v518 = vsel %vm508, 1, 0
        %v519 = vsel %vm509, 1, 0
        %v520 = vsel %vm510, 1, 0
        %v521 = vsel %vm511, 1, 0
        %v522 = vsel %vm512, 1, 0
        %v523 = vsel %vm513, 1, 0
        %v524 = vsel %vm514, 1, 0
        %vm525 = vcmp.eq.s32.totalorder %v515, 1
        %vm526 = vcmp.eq.s32.totalorder %v516, 1
        %vm527 = vcmp.eq.s32.totalorder %v517, 1
        %vm528 = vcmp.eq.s32.totalorder %v518, 1
        %vm529 = vcmp.eq.s32.totalorder %v519, 1
        %vm530 = vcmp.eq.s32.totalorder %v520, 1
        %vm531 = vcmp.eq.s32.totalorder %v521, 1
        %vm532 = vcmp.eq.s32.totalorder %v522, 1
        %vm533 = vcmp.eq.s32.totalorder %v523, 1
        %vm534 = vcmp.eq.s32.totalorder %v524, 1
        %v535 = vsel %vm525, %v396, 0.0
        %v536 = vsel %vm525, %v399, 0.0
        %v537 = vsel %vm526, %v404, 0.0
        %v538 = vsel %vm526, %v407, 0.0
        %v539 = vsel %vm527, %v412, 0.0
        %v540 = vsel %vm527, %v415, 0.0
        %v541 = vsel %vm528, %v420, 0.0
        %v542 = vsel %vm528, %v423, 0.0
        %v543 = vsel %vm529, %v428, 0.0
        %v544 = vsel %vm529, %v431, 0.0
        %v545 = vsel %vm530, %v436, 0.0
        %v546 = vsel %vm530, %v439, 0.0
        %v547 = vsel %vm531, %v444, 0.0
        %v548 = vsel %vm531, %v447, 0.0
        %v549 = vsel %vm532, %v452, 0.0
        %v550 = vsel %vm532, %v455, 0.0
        %v551 = vsel %vm533, %v460, 0.0
        %v552 = vsel %vm533, %v463, 0.0
        %v553 = vsel %vm534, %v468, 0.0
        %v554 = vsel %vm534, %v471, 0.0
        %v555 = vpack.c.bf16 %v536, %v535
        %v556 = vpack.c.bf16 %v538, %v537
        %v557 = vpack.c.bf16 %v540, %v539
        %v558 = vpack.c.bf16 %v542, %v541
        %v559 = vpack.c.bf16 %v544, %v543
        %v560 = vpack.c.bf16 %v546, %v545
        %v561 = vpack.c.bf16 %v548, %v547
        %v562 = vpack.c.bf16 %v550, %v549
        %v563 = vpack.c.bf16 %v552, %v551
        %v564 = vpack.c.bf16 %v554, %v553
        %565 = vst [vmem:[#allocation3] sm:$0xff] 0
        %566 = vst [vmem:[#allocation3 + $0x18] sm:$0xff] 0
        %567 = vst [vmem:[#allocation3 + $0x30] sm:$0xff] 0
        %568 = vst [vmem:[#allocation3 + $0x48] sm:$0xff] 0
        %569 = vst [vmem:[#allocation3 + $0x60] sm:$0xff] 0
        %570 = vst [vmem:[#allocation3 + $0x78] sm:$0xff] 0
        %571 = vst [vmem:[#allocation3 + $0x90] sm:$0xff] 0
        %572 = vst [vmem:[#allocation3 + $0xa8] sm:$0xff] 0
        %573 = vst [vmem:[#allocation3 + $0xc0] sm:$0xff] 0
        %574 = vst [vmem:[#allocation3 + $0xd8] sm:$0xff] 0
        %575 = vst [vmem:[#allocation3 + $0x10] sm:$0xff] 0
        %576 = vst [vmem:[#allocation3 + $0x28] sm:$0xff] 0
        %577 = vst [vmem:[#allocation3 + $0x40] sm:$0xff] 0
        %578 = vst [vmem:[#allocation3 + $0x58] sm:$0xff] 0
        %579 = vst [vmem:[#allocation3 + $0x70] sm:$0xff] 0
        %580 = vst [vmem:[#allocation3 + $0x88] sm:$0xff] 0
        %581 = vst [vmem:[#allocation3 + $0xa0] sm:$0xff] 0
        %582 = vst [vmem:[#allocation3 + $0xb8] sm:$0xff] 0
        %583 = vst [vmem:[#allocation3 + $0xd0] sm:$0xff] 0
        %584 = vst [vmem:[#allocation3 + $0xe8] sm:$0xff] 0
        %585 = vst [vmem:[#allocation3 + $0x8] sm:$0xff] %v555
        %586 = vst [vmem:[#allocation3 + $0x20] sm:$0xff] %v556
        %587 = vst [vmem:[#allocation3 + $0x38] sm:$0xff] %v557
        %588 = vst [vmem:[#allocation3 + $0x50] sm:$0xff] %v558
        %589 = vst [vmem:[#allocation3 + $0x68] sm:$0xff] %v559
        %590 = vst [vmem:[#allocation3 + $0x80] sm:$0xff] %v560
        %591 = vst [vmem:[#allocation3 + $0x98] sm:$0xff] %v561
        %592 = vst [vmem:[#allocation3 + $0xb0] sm:$0xff] %v562
        %593 = vst [vmem:[#allocation3 + $0xc8] sm:$0xff] %v563
        %594 = vst [vmem:[#allocation3 + $0xe0] sm:$0xff] %v564
        %v595 = vld [vmem:[#allocation3] sm:$0x80]
        %v596 = vld [vmem:[#allocation3 + $0x8] sm:$0xff]
        %v597 = vld [vmem:[#allocation3 + $0x18] sm:$0x80]
        %v598 = vld [vmem:[#allocation3 + $0x20] sm:$0xff]
        %v599 = vld [vmem:[#allocation3 + $0x30] sm:$0x80]
        %v600 = vld [vmem:[#allocation3 + $0x38] sm:$0xff]
        %v601 = vld [vmem:[#allocation3 + $0x48] sm:$0x80]
        %v602 = vld [vmem:[#allocation3 + $0x50] sm:$0xff]
        %v603 = vld [vmem:[#allocation3 + $0x60] sm:$0x80]
        %v604 = vld [vmem:[#allocation3 + $0x68] sm:$0xff]
        %v605 = vld [vmem:[#allocation3 + $0x78] sm:$0x80]
        %v606 = vld [vmem:[#allocation3 + $0x80] sm:$0xff]
        %v607 = vld [vmem:[#allocation3 + $0x90] sm:$0x80]
        %v608 = vld [vmem:[#allocation3 + $0x98] sm:$0xff]
        %v609 = vld [vmem:[#allocation3 + $0xa8] sm:$0x80]
        %v610 = vld [vmem:[#allocation3 + $0xb0] sm:$0xff]
        %v611 = vld [vmem:[#allocation3 + $0xc0] sm:$0x80]
        %v612 = vld [vmem:[#allocation3 + $0xc8] sm:$0xff]
        %v613 = vld [vmem:[#allocation3 + $0xd8] sm:$0x80]
        %v614 = vld [vmem:[#allocation3 + $0xe0] sm:$0xff]
        %vm615 = vsmask.f32 256
        %v617 = vshrl.u32 %v595, 16
        %v619 = vrot.slane %v617, 7
        %v621 = vshrl.u32 %v596, 16
        %v623 = vrot.slane %v621, 7
        %v624 = vshll.u32 %v596, 16
        %v626 = vor.u32 %v623, %v624
        %v627 = vsel %vm615, %v619, %v626
        %v629 = vshrl.u32 %v597, 16
        %v631 = vrot.slane %v629, 7
        %v633 = vshrl.u32 %v598, 16
        %v635 = vrot.slane %v633, 7
        %v636 = vshll.u32 %v598, 16
        %v638 = vor.u32 %v635, %v636
        %v639 = vsel %vm615, %v631, %v638
        %v641 = vshrl.u32 %v599, 16
        %v643 = vrot.slane %v641, 7
        %v645 = vshrl.u32 %v600, 16
        %v647 = vrot.slane %v645, 7
        %v648 = vshll.u32 %v600, 16
        %v650 = vor.u32 %v647, %v648
        %v651 = vsel %vm615, %v643, %v650
        %v653 = vshrl.u32 %v601, 16
        %v655 = vrot.slane %v653, 7
        %v657 = vshrl.u32 %v602, 16
        %v659 = vrot.slane %v657, 7
        %v660 = vshll.u32 %v602, 16
        %v662 = vor.u32 %v659, %v660
        %v663 = vsel %vm615, %v655, %v662
        %v665 = vshrl.u32 %v603, 16
        %v667 = vrot.slane %v665, 7
        %v669 = vshrl.u32 %v604, 16
        %v671 = vrot.slane %v669, 7
        %v672 = vshll.u32 %v604, 16
        %v674 = vor.u32 %v671, %v672
        %v675 = vsel %vm615, %v667, %v674
        %v677 = vshrl.u32 %v605, 16
        %v679 = vrot.slane %v677, 7
        %v681 = vshrl.u32 %v606, 16
        %v683 = vrot.slane %v681, 7
        %v684 = vshll.u32 %v606, 16
        %v686 = vor.u32 %v683, %v684
        %v687 = vsel %vm615, %v679, %v686
        %v689 = vshrl.u32 %v607, 16
        %v691 = vrot.slane %v689, 7
        %v693 = vshrl.u32 %v608, 16
        %v695 = vrot.slane %v693, 7
        %v696 = vshll.u32 %v608, 16
        %v698 = vor.u32 %v695, %v696
        %v699 = vsel %vm615, %v691, %v698
        %v701 = vshrl.u32 %v609, 16
        %v703 = vrot.slane %v701, 7
        %v705 = vshrl.u32 %v610, 16
        %v707 = vrot.slane %v705, 7
        %v708 = vshll.u32 %v610, 16
        %v710 = vor.u32 %v707, %v708
        %v711 = vsel %vm615, %v703, %v710
        %v720 = vld [vmem:[#allocation8] sm:$0xf]
        %v721 = vld [vmem:[#allocation8 + $0x4] sm:$0xf]
        %v722 = vld [vmem:[#allocation8 + $0x8] sm:$0xf]
        %v723 = vld [vmem:[#allocation8 + $0xc] sm:$0xf]
        %v724 = vld [vmem:[#allocation8 + $0x10] sm:$0xf]
        %v725 = vld [vmem:[#allocation8 + $0x14] sm:$0xf]
        %v726 = vld [vmem:[#allocation8 + $0x18] sm:$0xf]
        %v727 = vld [vmem:[#allocation8 + $0x1c] sm:$0xf]
        %v728 = vld [vmem:[#allocation8 + $0x20] sm:$0xf]
        %v729 = vld [vmem:[#allocation8 + $0x24] sm:$0xf]
        %v730 = vld [vmem:[#allocation8 + $0x28] sm:$0xf]
        %v731 = vld [vmem:[#allocation8 + $0x2c] sm:$0xf]
        %v732 = vld [vmem:[#allocation8 + $0x30] sm:$0xf]
        %v733 = vld [vmem:[#allocation8 + $0x34] sm:$0xf]
        %v734 = vld [vmem:[#allocation8 + $0x38] sm:$0xf]
        %v735 = vld [vmem:[#allocation8 + $0x3c] sm:$0xf]
        %v737 = vshrl.u32 %v611, 16
        %v739 = vrot.slane %v737, 7
        %v741 = vshrl.u32 %v612, 16
        %v743 = vrot.slane %v741, 7
        %v744 = vshll.u32 %v612, 16
        %v746 = vor.u32 %v743, %v744
        %v747 = vsel %vm615, %v739, %v746
        %s749 = scalar_lea.vmem [#allocation8], 192
        %v750 = vld [vmem:[%s749] sm:$0xf]
        %v751 = vld [vmem:[%s749 + $0x4] sm:$0xf]
        %v752 = vld [vmem:[%s749 + $0x8] sm:$0xf]
        %v753 = vld [vmem:[%s749 + $0xc] sm:$0xf]
        %v754 = vld [vmem:[%s749 + $0x10] sm:$0xf]
        %v755 = vld [vmem:[%s749 + $0x14] sm:$0xf]
        %v756 = vld [vmem:[%s749 + $0x18] sm:$0xf]
        %v757 = vld [vmem:[%s749 + $0x1c] sm:$0xf]
        %v758 = vld [vmem:[%s749 + $0x20] sm:$0xf]
        %v759 = vld [vmem:[%s749 + $0x24] sm:$0xf]
        %v760 = vld [vmem:[%s749 + $0x28] sm:$0xf]
        %v761 = vld [vmem:[%s749 + $0x2c] sm:$0xf]
        %v762 = vld [vmem:[%s749 + $0x30] sm:$0xf]
        %v763 = vld [vmem:[%s749 + $0x34] sm:$0xf]
        %v764 = vld [vmem:[%s749 + $0x38] sm:$0xf]
        %v765 = vld [vmem:[%s749 + $0x3c] sm:$0xf]
        %v782 = vunpack.c.l.b16 %v750
        %v783 = vunpack.c.l.b16 %v751
        %v784 = vunpack.c.l.b16 %v752
        %v785 = vunpack.c.l.b16 %v753
        %v786 = vunpack.c.l.b16 %v754
        %v787 = vunpack.c.l.b16 %v755
        %v788 = vunpack.c.l.b16 %v756
        %v789 = vunpack.c.l.b16 %v757
        %v790 = vunpack.c.l.b16 %v758
        %v791 = vunpack.c.l.b16 %v759
        %v792 = vunpack.c.l.b16 %v760
        %v793 = vunpack.c.l.b16 %v761
        %v794 = vunpack.c.l.b16 %v762
        %v795 = vunpack.c.l.b16 %v763
        %v796 = vunpack.c.l.b16 %v764
        %v797 = vunpack.c.l.b16 %v765
        %v798 = vpack.c.b16 %v783, %v782
        %v799 = vpack.c.b16 %v785, %v784
        %v800 = vpack.c.b16 %v787, %v786
        %v801 = vpack.c.b16 %v789, %v788
        %v802 = vpack.c.b16 %v791, %v790
        %v803 = vpack.c.b16 %v793, %v792
        %v804 = vpack.c.b16 %v795, %v794
        %v805 = vpack.c.b16 %v797, %v796
        %814 = vmatprep.subr.bf16.mxu0 0
        %815 = vmatpush1.bf16.msra.mxu0 %v798
        %816 = vmatprep.subr.bf16.mxu0 0
        %817 = vmatpush1.bf16.msra.mxu0 %v799
        %818 = vmatprep.subr.bf16.mxu0 0
        %819 = vmatpush1.bf16.msra.mxu0 %v800
        %820 = vmatprep.subr.bf16.mxu0 0
        %821 = vmatpush1.bf16.msra.mxu0 %v801
        %822 = vmatprep.subr.bf16.mxu0 0
        %823 = vmatpush1.bf16.msra.mxu0 %v802
        %824 = vmatprep.subr.bf16.mxu0 0
        %825 = vmatpush1.bf16.msra.mxu0 %v803
        %826 = vmatprep.subr.bf16.mxu0 0
        %827 = vmatpush1.bf16.msra.mxu0 %v804
        %828 = vmatprep.subr.bf16.mxu0 0
        %829 = vmatpush1.bf16.msra.mxu0 %v805
        %830 = vmatprep.subr.bf16.mxu0 0
        %831 = vmatpush1.bf16.msra.mxu0 0
        %832 = vmatprep.subr.bf16.mxu0 0
        %833 = vmatpush1.bf16.msra.mxu0 0
        %834 = vmatprep.subr.bf16.mxu0 0
        %835 = vmatpush1.bf16.msra.mxu0 0
        %836 = vmatprep.subr.bf16.mxu0 0
        %837 = vmatpush1.bf16.msra.mxu0 0
        %838 = vmatprep.subr.bf16.mxu0 0
        %839 = vmatpush1.bf16.msra.mxu0 0
        %840 = vmatprep.subr.bf16.mxu0 0
        %841 = vmatpush1.bf16.msra.mxu0 0
        %842 = vmatprep.subr.bf16.mxu0 0
        %843 = vmatpush1.bf16.msra.mxu0 0
        %844 = vmatprep.subr.bf16.mxu0 0
        %845 = vmatpush1.bf16.msra.mxu0 0
        %846 = vmatprep.mubr.bf16.mxu0 0
        %847 = vmatmul.mubr.bf16.gmra.mrb[0].mxu0 %v639
        %v848 = vpop.f32.mrb[0].mxu0
        %v849 = vadd.f32 0.0, %v848
        %v850 = vpop.f32.mrb[0].mxu0
        %v851 = vpop.f32.mrb[0].mxu0
        %v852 = vadd.f32 0.0, %v851
        %v853 = vpop.f32.mrb[0].mxu0
        %854 = vmatprep.mubr.bf16.mxu0 0
        %855 = vmatmul.mubr.bf16.gmra.mrb[0].mxu0 %v651
        %v856 = vpop.f32.mrb[0].mxu0
        %v857 = vadd.f32 0.0, %v856
        %v858 = vpop.f32.mrb[0].mxu0
        %v859 = vpop.f32.mrb[0].mxu0
        %v860 = vadd.f32 0.0, %v859
        %v861 = vpop.f32.mrb[0].mxu0
        %862 = vmatprep.mubr.bf16.mxu0 0
        %863 = vmatmul.mubr.bf16.gmra.mrb[0].mxu0 %v663
        %v864 = vpop.f32.mrb[0].mxu0
        %v865 = vadd.f32 0.0, %v864
        %v866 = vpop.f32.mrb[0].mxu0
        %v867 = vpop.f32.mrb[0].mxu0
        %v868 = vadd.f32 0.0, %v867
        %v869 = vpop.f32.mrb[0].mxu0
        %870 = vmatprep.mubr.bf16.mxu0 0
        %871 = vmatmul.mubr.bf16.gmra.mrb[0].mxu0 %v675
        %v872 = vpop.f32.mrb[0].mxu0
        %v873 = vadd.f32 0.0, %v872
        %v874 = vpop.f32.mrb[0].mxu0
        %v875 = vpop.f32.mrb[0].mxu0
        %v876 = vadd.f32 0.0, %v875
        %v877 = vpop.f32.mrb[0].mxu0
        %878 = vmatprep.mubr.bf16.mxu0 0
        %879 = vmatmul.mubr.bf16.gmra.mrb[0].mxu0 %v687
        %v880 = vpop.f32.mrb[0].mxu0
        %v881 = vadd.f32 0.0, %v880
        %v882 = vpop.f32.mrb[0].mxu0
        %v883 = vpop.f32.mrb[0].mxu0
        %v884 = vadd.f32 0.0, %v883
        %v885 = vpop.f32.mrb[0].mxu0
        %886 = vmatprep.mubr.bf16.mxu0 0
        %887 = vmatmul.mubr.bf16.gmra.mrb[0].mxu0 %v699
        %v888 = vpop.f32.mrb[0].mxu0
        %v889 = vadd.f32 0.0, %v888
        %v890 = vpop.f32.mrb[0].mxu0
        %v891 = vpop.f32.mrb[0].mxu0
        %v892 = vadd.f32 0.0, %v891
        %v893 = vpop.f32.mrb[0].mxu0
        %894 = vmatprep.mubr.bf16.mxu0 0
        %895 = vmatmul.mubr.bf16.gmra.mrb[0].mxu0 %v711
        %v896 = vpop.f32.mrb[0].mxu0
        %v897 = vadd.f32 0.0, %v896
        %v898 = vpop.f32.mrb[0].mxu0
        %v899 = vpop.f32.mrb[0].mxu0
        %v900 = vadd.f32 0.0, %v899
        %v901 = vpop.f32.mrb[0].mxu0
        %902 = vmatprep.mubr.bf16.mxu0 0
        %903 = vmatmul.mubr.bf16.gmra.mrb[0].mxu0 %v747
        %v904 = vpop.f32.mrb[0].mxu0
        %v905 = vadd.f32 0.0, %v904
        %v906 = vpop.f32.mrb[0].mxu0
        %v907 = vpop.f32.mrb[0].mxu0
        %v908 = vadd.f32 0.0, %v907
        %v909 = vpop.f32.mrb[0].mxu0
        %910 = vdwg.mxu0
        %v927 = vunpack.c.l.b16 %v720
        %v928 = vunpack.c.l.b16 %v721
        %v929 = vunpack.c.l.b16 %v722
        %v930 = vunpack.c.l.b16 %v723
        %v931 = vunpack.c.l.b16 %v724
        %v932 = vunpack.c.l.b16 %v725
        %v933 = vunpack.c.l.b16 %v726
        %v934 = vunpack.c.l.b16 %v727
        %v935 = vunpack.c.l.b16 %v728
        %v936 = vunpack.c.l.b16 %v729
        %v937 = vunpack.c.l.b16 %v730
        %v938 = vunpack.c.l.b16 %v731
        %v939 = vunpack.c.l.b16 %v732
        %v940 = vunpack.c.l.b16 %v733
        %v941 = vunpack.c.l.b16 %v734
        %v942 = vunpack.c.l.b16 %v735
        %v943 = vpack.c.b16 %v928, %v927
        %v944 = vpack.c.b16 %v930, %v929
        %v945 = vpack.c.b16 %v932, %v931
        %v946 = vpack.c.b16 %v934, %v933
        %v947 = vpack.c.b16 %v936, %v935
        %v948 = vpack.c.b16 %v938, %v937
        %v949 = vpack.c.b16 %v940, %v939
        %v950 = vpack.c.b16 %v942, %v941
        %959 = vmatprep.subr.bf16.mxu0 0
        %960 = vmatpush1.bf16.msra.mxu0 %v943
        %961 = vmatprep.subr.bf16.mxu0 0
        %962 = vmatpush1.bf16.msra.mxu0 %v944
        %963 = vmatprep.subr.bf16.mxu0 0
        %964 = vmatpush1.bf16.msra.mxu0 %v945
        %965 = vmatprep.subr.bf16.mxu0 0
        %966 = vmatpush1.bf16.msra.mxu0 %v946
        %967 = vmatprep.subr.bf16.mxu0 0
        %968 = vmatpush1.bf16.msra.mxu0 %v947
        %969 = vmatprep.subr.bf16.mxu0 0
        %970 = vmatpush1.bf16.msra.mxu0 %v948
        %971 = vmatprep.subr.bf16.mxu0 0
        %972 = vmatpush1.bf16.msra.mxu0 %v949
        %973 = vmatprep.subr.bf16.mxu0 0
        %974 = vmatpush1.bf16.msra.mxu0 %v950
        %975 = vmatprep.subr.bf16.mxu0 0
        %976 = vmatpush1.bf16.msra.mxu0 0
        %977 = vmatprep.subr.bf16.mxu0 0
        %978 = vmatpush1.bf16.msra.mxu0 0
        %979 = vmatprep.subr.bf16.mxu0 0
        %980 = vmatpush1.bf16.msra.mxu0 0
        %981 = vmatprep.subr.bf16.mxu0 0
        %982 = vmatpush1.bf16.msra.mxu0 0
        %983 = vmatprep.subr.bf16.mxu0 0
        %984 = vmatpush1.bf16.msra.mxu0 0
        %985 = vmatprep.subr.bf16.mxu0 0
        %986 = vmatpush1.bf16.msra.mxu0 0
        %987 = vmatprep.subr.bf16.mxu0 0
        %988 = vmatpush1.bf16.msra.mxu0 0
        %989 = vmatprep.subr.bf16.mxu0 0
        %990 = vmatpush1.bf16.msra.mxu0 0
        %991 = vmatprep.mubr.bf16.mxu0 0
        %992 = vmatmul.mubr.bf16.gmra.mrb[0].mxu0 %v627
        %v993 = vpop.f32.mrb[0].mxu0
        %v994 = vadd.f32 %v849, %v993
        %v995 = vpop.f32.mrb[0].mxu0
        %v996 = vpop.f32.mrb[0].mxu0
        %v997 = vadd.f32 %v852, %v996
        %v998 = vpop.f32.mrb[0].mxu0
        %999 = vmatprep.mubr.bf16.mxu0 0
        %1000 = vmatmul.mubr.bf16.gmra.mrb[0].mxu0 %v639
        %v1001 = vpop.f32.mrb[0].mxu0
        %v1002 = vadd.f32 %v857, %v1001
        %v1003 = vpop.f32.mrb[0].mxu0
        %v1004 = vpop.f32.mrb[0].mxu0
        %v1005 = vadd.f32 %v860, %v1004
        %v1006 = vpop.f32.mrb[0].mxu0
        %1007 = vmatprep.mubr.bf16.mxu0 0
        %1008 = vmatmul.mubr.bf16.gmra.mrb[0].mxu0 %v651
        %v1009 = vpop.f32.mrb[0].mxu0
        %v1010 = vadd.f32 %v865, %v1009
        %v1011 = vpop.f32.mrb[0].mxu0
        %v1012 = vpop.f32.mrb[0].mxu0
        %v1013 = vadd.f32 %v868, %v1012
        %v1014 = vpop.f32.mrb[0].mxu0
        %1015 = vmatprep.mubr.bf16.mxu0 0
        %1016 = vmatmul.mubr.bf16.gmra.mrb[0].mxu0 %v663
        %v1017 = vpop.f32.mrb[0].mxu0
        %v1018 = vadd.f32 %v873, %v1017
        %v1019 = vpop.f32.mrb[0].mxu0
        %v1020 = vpop.f32.mrb[0].mxu0
        %v1021 = vadd.f32 %v876, %v1020
        %v1022 = vpop.f32.mrb[0].mxu0
        %1023 = vmatprep.mubr.bf16.mxu0 0
        %1024 = vmatmul.mubr.bf16.gmra.mrb[0].mxu0 %v675
        %v1025 = vpop.f32.mrb[0].mxu0
        %v1026 = vadd.f32 %v881, %v1025
        %v1027 = vpop.f32.mrb[0].mxu0
        %v1028 = vpop.f32.mrb[0].mxu0
        %v1029 = vadd.f32 %v884, %v1028
        %v1030 = vpop.f32.mrb[0].mxu0
        %1031 = vmatprep.mubr.bf16.mxu0 0
        %1032 = vmatmul.mubr.bf16.gmra.mrb[0].mxu0 %v687
        %v1033 = vpop.f32.mrb[0].mxu0
        %v1034 = vadd.f32 %v889, %v1033
        %v1035 = vpop.f32.mrb[0].mxu0
        %v1036 = vpop.f32.mrb[0].mxu0
        %v1037 = vadd.f32 %v892, %v1036
        %v1038 = vpop.f32.mrb[0].mxu0
        %1039 = vmatprep.mubr.bf16.mxu0 0
        %1040 = vmatmul.mubr.bf16.gmra.mrb[0].mxu0 %v699
        %v1041 = vpop.f32.mrb[0].mxu0
        %v1042 = vadd.f32 %v897, %v1041
        %v1043 = vpop.f32.mrb[0].mxu0
        %v1044 = vpop.f32.mrb[0].mxu0
        %v1045 = vadd.f32 %v900, %v1044
        %v1046 = vpop.f32.mrb[0].mxu0
        %1047 = vmatprep.mubr.bf16.mxu0 0
        %1048 = vmatmul.mubr.bf16.gmra.mrb[0].mxu0 %v711
        %v1049 = vpop.f32.mrb[0].mxu0
        %v1050 = vadd.f32 %v905, %v1049
        %v1051 = vpop.f32.mrb[0].mxu0
        %v1052 = vpop.f32.mrb[0].mxu0
        %v1053 = vadd.f32 %v908, %v1052
        %v1054 = vpop.f32.mrb[0].mxu0
        %1055 = vdwg.mxu0
        %v1057 = vshrl.u32 %v613, 16
        %v1059 = vrot.slane %v1057, 7
        %v1061 = vshrl.u32 %v614, 16
        %v1063 = vrot.slane %v1061, 7
        %v1064 = vshll.u32 %v614, 16
        %v1066 = vor.u32 %v1063, %v1064
        %v1067 = vsel %vm615, %v1059, %v1066
        %s1069 = scalar_lea.vmem [#allocation8], 384
        %v1070 = vld [vmem:[%s1069] sm:$0xf]
        %v1071 = vld [vmem:[%s1069 + $0x4] sm:$0xf]
        %v1072 = vld [vmem:[%s1069 + $0x8] sm:$0xf]
        %v1073 = vld [vmem:[%s1069 + $0xc] sm:$0xf]
        %v1074 = vld [vmem:[%s1069 + $0x10] sm:$0xf]
        %v1075 = vld [vmem:[%s1069 + $0x14] sm:$0xf]
        %v1076 = vld [vmem:[%s1069 + $0x18] sm:$0xf]
        %v1077 = vld [vmem:[%s1069 + $0x1c] sm:$0xf]
        %v1078 = vld [vmem:[%s1069 + $0x20] sm:$0xf]
        %v1079 = vld [vmem:[%s1069 + $0x24] sm:$0xf]
        %v1080 = vld [vmem:[%s1069 + $0x28] sm:$0xf]
        %v1081 = vld [vmem:[%s1069 + $0x2c] sm:$0xf]
        %v1082 = vld [vmem:[%s1069 + $0x30] sm:$0xf]
        %v1083 = vld [vmem:[%s1069 + $0x34] sm:$0xf]
        %v1084 = vld [vmem:[%s1069 + $0x38] sm:$0xf]
        %v1085 = vld [vmem:[%s1069 + $0x3c] sm:$0xf]
        %v1102 = vunpack.c.l.b16 %v1070
        %v1103 = vunpack.c.l.b16 %v1071
        %v1104 = vunpack.c.l.b16 %v1072
        %v1105 = vunpack.c.l.b16 %v1073
        %v1106 = vunpack.c.l.b16 %v1074
        %v1107 = vunpack.c.l.b16 %v1075
        %v1108 = vunpack.c.l.b16 %v1076
        %v1109 = vunpack.c.l.b16 %v1077
        %v1110 = vunpack.c.l.b16 %v1078
        %v1111 = vunpack.c.l.b16 %v1079
        %v1112 = vunpack.c.l.b16 %v1080
        %v1113 = vunpack.c.l.b16 %v1081
        %v1114 = vunpack.c.l.b16 %v1082
        %v1115 = vunpack.c.l.b16 %v1083
        %v1116 = vunpack.c.l.b16 %v1084
        %v1117 = vunpack.c.l.b16 %v1085
        %v1118 = vpack.c.b16 %v1103, %v1102
        %v1119 = vpack.c.b16 %v1105, %v1104
        %v1120 = vpack.c.b16 %v1107, %v1106
        %v1121 = vpack.c.b16 %v1109, %v1108
        %v1122 = vpack.c.b16 %v1111, %v1110
        %v1123 = vpack.c.b16 %v1113, %v1112
        %v1124 = vpack.c.b16 %v1115, %v1114
        %v1125 = vpack.c.b16 %v1117, %v1116
        %1134 = vmatprep.subr.bf16.mxu0 0
        %1135 = vmatpush1.bf16.msra.mxu0 %v1118
        %1136 = vmatprep.subr.bf16.mxu0 0
        %1137 = vmatpush1.bf16.msra.mxu0 %v1119
        %1138 = vmatprep.subr.bf16.mxu0 0
        %1139 = vmatpush1.bf16.msra.mxu0 %v1120
        %1140 = vmatprep.subr.bf16.mxu0 0
        %1141 = vmatpush1.bf16.msra.mxu0 %v1121
        %1142 = vmatprep.subr.bf16.mxu0 0
        %1143 = vmatpush1.bf16.msra.mxu0 %v1122
        %1144 = vmatprep.subr.bf16.mxu0 0
        %1145 = vmatpush1.bf16.msra.mxu0 %v1123
        %1146 = vmatprep.subr.bf16.mxu0 0
        %1147 = vmatpush1.bf16.msra.mxu0 %v1124
        %1148 = vmatprep.subr.bf16.mxu0 0
        %1149 = vmatpush1.bf16.msra.mxu0 %v1125
        %1150 = vmatprep.subr.bf16.mxu0 0
        %1151 = vmatpush1.bf16.msra.mxu0 0
        %1152 = vmatprep.subr.bf16.mxu0 0
        %1153 = vmatpush1.bf16.msra.mxu0 0
        %1154 = vmatprep.subr.bf16.mxu0 0
        %1155 = vmatpush1.bf16.msra.mxu0 0
        %1156 = vmatprep.subr.bf16.mxu0 0
        %1157 = vmatpush1.bf16.msra.mxu0 0
        %1158 = vmatprep.subr.bf16.mxu0 0
        %1159 = vmatpush1.bf16.msra.mxu0 0
        %1160 = vmatprep.subr.bf16.mxu0 0
        %1161 = vmatpush1.bf16.msra.mxu0 0
        %1162 = vmatprep.subr.bf16.mxu0 0
        %1163 = vmatpush1.bf16.msra.mxu0 0
        %1164 = vmatprep.subr.bf16.mxu0 0
        %1165 = vmatpush1.bf16.msra.mxu0 0
        %1166 = vmatprep.mubr.bf16.mxu0 0
        %1167 = vmatmul.mubr.bf16.gmra.mrb[0].mxu0 %v651
        %v1168 = vpop.f32.mrb[0].mxu0
        %v1169 = vadd.f32 0.0, %v1168
        %v1170 = vpop.f32.mrb[0].mxu0
        %v1171 = vpop.f32.mrb[0].mxu0
        %v1172 = vadd.f32 0.0, %v1171
        %v1173 = vpop.f32.mrb[0].mxu0
        %1174 = vmatprep.mubr.bf16.mxu0 0
        %1175 = vmatmul.mubr.bf16.gmra.mrb[0].mxu0 %v663
        %v1176 = vpop.f32.mrb[0].mxu0
        %v1177 = vadd.f32 0.0, %v1176
        %v1178 = vpop.f32.mrb[0].mxu0
        %v1179 = vpop.f32.mrb[0].mxu0
        %v1180 = vadd.f32 0.0, %v1179
        %v1181 = vpop.f32.mrb[0].mxu0
        %1182 = vmatprep.mubr.bf16.mxu0 0
        %1183 = vmatmul.mubr.bf16.gmra.mrb[0].mxu0 %v675
        %v1184 = vpop.f32.mrb[0].mxu0
        %v1185 = vadd.f32 0.0, %v1184
        %v1186 = vpop.f32.mrb[0].mxu0
        %v1187 = vpop.f32.mrb[0].mxu0
        %v1188 = vadd.f32 0.0, %v1187
        %v1189 = vpop.f32.mrb[0].mxu0
        %1190 = vmatprep.mubr.bf16.mxu0 0
        %1191 = vmatmul.mubr.bf16.gmra.mrb[0].mxu0 %v687
        %v1192 = vpop.f32.mrb[0].mxu0
        %v1193 = vadd.f32 0.0, %v1192
        %v1194 = vpop.f32.mrb[0].mxu0
        %v1195 = vpop.f32.mrb[0].mxu0
        %v1196 = vadd.f32 0.0, %v1195
        %v1197 = vpop.f32.mrb[0].mxu0
        %1198 = vmatprep.mubr.bf16.mxu0 0
        %1199 = vmatmul.mubr.bf16.gmra.mrb[0].mxu0 %v699
        %v1200 = vpop.f32.mrb[0].mxu0
        %v1201 = vadd.f32 0.0, %v1200
        %v1202 = vpop.f32.mrb[0].mxu0
        %v1203 = vpop.f32.mrb[0].mxu0
        %v1204 = vadd.f32 0.0, %v1203
        %v1205 = vpop.f32.mrb[0].mxu0
        %1206 = vmatprep.mubr.bf16.mxu0 0
        %1207 = vmatmul.mubr.bf16.gmra.mrb[0].mxu0 %v711
        %v1208 = vpop.f32.mrb[0].mxu0
        %v1209 = vadd.f32 0.0, %v1208
        %v1210 = vpop.f32.mrb[0].mxu0
        %v1211 = vpop.f32.mrb[0].mxu0
        %v1212 = vadd.f32 0.0, %v1211
        %v1213 = vpop.f32.mrb[0].mxu0
        %1214 = vmatprep.mubr.bf16.mxu0 0
        %1215 = vmatmul.mubr.bf16.gmra.mrb[0].mxu0 %v747
        %v1216 = vpop.f32.mrb[0].mxu0
        %v1217 = vadd.f32 0.0, %v1216
        %v1218 = vpop.f32.mrb[0].mxu0
        %v1219 = vpop.f32.mrb[0].mxu0
        %v1220 = vadd.f32 0.0, %v1219
        %v1221 = vpop.f32.mrb[0].mxu0
        %1222 = vmatprep.mubr.bf16.mxu0 0
        %1223 = vmatmul.mubr.bf16.gmra.mrb[0].mxu0 %v1067
        %v1224 = vpop.f32.mrb[0].mxu0
        %v1225 = vadd.f32 0.0, %v1224
        %v1226 = vpop.f32.mrb[0].mxu0
        %v1227 = vpop.f32.mrb[0].mxu0
        %v1228 = vadd.f32 0.0, %v1227
        %v1229 = vpop.f32.mrb[0].mxu0
        %1230 = vdwg.mxu0
        %v1231 = vadd.f32 %v994, %v1169
        %v1232 = vadd.f32 %v997, %v1172
        %v1233 = vadd.f32 %v1002, %v1177
        %v1234 = vadd.f32 %v1005, %v1180
        %v1235 = vadd.f32 %v1010, %v1185
        %v1236 = vadd.f32 %v1013, %v1188
        %v1237 = vadd.f32 %v1018, %v1193
        %v1238 = vadd.f32 %v1021, %v1196
        %v1239 = vadd.f32 %v1026, %v1201
        %v1240 = vadd.f32 %v1029, %v1204
        %v1241 = vadd.f32 %v1034, %v1209
        %v1242 = vadd.f32 %v1037, %v1212
        %v1243 = vadd.f32 %v1042, %v1217
        %v1244 = vadd.f32 %v1045, %v1220
        %v1245 = vadd.f32 %v1050, %v1225
        %v1246 = vadd.f32 %v1053, %v1228
        %s1247 = scalar_lea.vmem [#allocation8], 64
        %v1248 = vld [vmem:[%s1247] sm:$0xf]
        %v1249 = vld [vmem:[%s1247 + $0x4] sm:$0xf]
        %v1250 = vld [vmem:[%s1247 + $0x8] sm:$0xf]
        %v1251 = vld [vmem:[%s1247 + $0xc] sm:$0xf]
        %v1252 = vld [vmem:[%s1247 + $0x10] sm:$0xf]
        %v1253 = vld [vmem:[%s1247 + $0x14] sm:$0xf]
        %v1254 = vld [vmem:[%s1247 + $0x18] sm:$0xf]
        %v1255 = vld [vmem:[%s1247 + $0x1c] sm:$0xf]
        %v1256 = vld [vmem:[%s1247 + $0x20] sm:$0xf]
        %v1257 = vld [vmem:[%s1247 + $0x24] sm:$0xf]
        %v1258 = vld [vmem:[%s1247 + $0x28] sm:$0xf]
        %v1259 = vld [vmem:[%s1247 + $0x2c] sm:$0xf]
        %v1260 = vld [vmem:[%s1247 + $0x30] sm:$0xf]
        %v1261 = vld [vmem:[%s1247 + $0x34] sm:$0xf]
        %v1262 = vld [vmem:[%s1247 + $0x38] sm:$0xf]
        %v1263 = vld [vmem:[%s1247 + $0x3c] sm:$0xf]
        %v1280 = vunpack.c.l.b16 %v1248
        %v1281 = vunpack.c.l.b16 %v1249
        %v1282 = vunpack.c.l.b16 %v1250
        %v1283 = vunpack.c.l.b16 %v1251
        %v1284 = vunpack.c.l.b16 %v1252
        %v1285 = vunpack.c.l.b16 %v1253
        %v1286 = vunpack.c.l.b16 %v1254
        %v1287 = vunpack.c.l.b16 %v1255
        %v1288 = vunpack.c.l.b16 %v1256
        %v1289 = vunpack.c.l.b16 %v1257
        %v1290 = vunpack.c.l.b16 %v1258
        %v1291 = vunpack.c.l.b16 %v1259
        %v1292 = vunpack.c.l.b16 %v1260
        %v1293 = vunpack.c.l.b16 %v1261
        %v1294 = vunpack.c.l.b16 %v1262
        %v1295 = vunpack.c.l.b16 %v1263
        %v1296 = vpack.c.b16 %v1281, %v1280
        %v1297 = vpack.c.b16 %v1283, %v1282
        %v1298 = vpack.c.b16 %v1285, %v1284
        %v1299 = vpack.c.b16 %v1287, %v1286
        %v1300 = vpack.c.b16 %v1289, %v1288
        %v1301 = vpack.c.b16 %v1291, %v1290
        %v1302 = vpack.c.b16 %v1293, %v1292
        %v1303 = vpack.c.b16 %v1295, %v1294
        %1312 = vmatprep.subr.bf16.mxu0 0
        %1313 = vmatpush1.bf16.msra.mxu0 %v1296
        %1314 = vmatprep.subr.bf16.mxu0 0
        %1315 = vmatpush1.bf16.msra.mxu0 %v1297
        %1316 = vmatprep.subr.bf16.mxu0 0
        %1317 = vmatpush1.bf16.msra.mxu0 %v1298
        %1318 = vmatprep.subr.bf16.mxu0 0
        %1319 = vmatpush1.bf16.msra.mxu0 %v1299
        %1320 = vmatprep.subr.bf16.mxu0 0
        %1321 = vmatpush1.bf16.msra.mxu0 %v1300
        %1322 = vmatprep.subr.bf16.mxu0 0
        %1323 = vmatpush1.bf16.msra.mxu0 %v1301
        %1324 = vmatprep.subr.bf16.mxu0 0
        %1325 = vmatpush1.bf16.msra.mxu0 %v1302
        %1326 = vmatprep.subr.bf16.mxu0 0
        %1327 = vmatpush1.bf16.msra.mxu0 %v1303
        %1328 = vmatprep.subr.bf16.mxu0 0
        %1329 = vmatpush1.bf16.msra.mxu0 0
        %1330 = vmatprep.subr.bf16.mxu0 0
        %1331 = vmatpush1.bf16.msra.mxu0 0
        %1332 = vmatprep.subr.bf16.mxu0 0
        %1333 = vmatpush1.bf16.msra.mxu0 0
        %1334 = vmatprep.subr.bf16.mxu0 0
        %1335 = vmatpush1.bf16.msra.mxu0 0
        %1336 = vmatprep.subr.bf16.mxu0 0
        %1337 = vmatpush1.bf16.msra.mxu0 0
        %1338 = vmatprep.subr.bf16.mxu0 0
        %1339 = vmatpush1.bf16.msra.mxu0 0
        %1340 = vmatprep.subr.bf16.mxu0 0
        %1341 = vmatpush1.bf16.msra.mxu0 0
        %1342 = vmatprep.subr.bf16.mxu0 0
        %1343 = vmatpush1.bf16.msra.mxu0 0
        %1344 = vmatprep.mubr.bf16.mxu0 0
        %1345 = vmatmul.mubr.bf16.gmra.mrb[0].mxu0 %v596
        %v1346 = vpop.f32.mrb[0].mxu0
        %v1347 = vadd.f32 0.0, %v1346
        %v1348 = vpop.f32.mrb[0].mxu0
        %v1349 = vpop.f32.mrb[0].mxu0
        %v1350 = vadd.f32 0.0, %v1349
        %v1351 = vpop.f32.mrb[0].mxu0
        %1352 = vmatprep.mubr.bf16.mxu0 0
        %1353 = vmatmul.mubr.bf16.gmra.mrb[0].mxu0 %v598
        %v1354 = vpop.f32.mrb[0].mxu0
        %v1355 = vadd.f32 0.0, %v1354
        %v1356 = vpop.f32.mrb[0].mxu0
        %v1357 = vpop.f32.mrb[0].mxu0
        %v1358 = vadd.f32 0.0, %v1357
        %v1359 = vpop.f32.mrb[0].mxu0
        %1360 = vmatprep.mubr.bf16.mxu0 0
        %1361 = vmatmul.mubr.bf16.gmra.mrb[0].mxu0 %v600
        %v1362 = vpop.f32.mrb[0].mxu0
        %v1363 = vadd.f32 0.0, %v1362
        %v1364 = vpop.f32.mrb[0].mxu0
        %v1365 = vpop.f32.mrb[0].mxu0
        %v1366 = vadd.f32 0.0, %v1365
        %v1367 = vpop.f32.mrb[0].mxu0
        %1368 = vmatprep.mubr.bf16.mxu0 0
        %1369 = vmatmul.mubr.bf16.gmra.mrb[0].mxu0 %v602
        %v1370 = vpop.f32.mrb[0].mxu0
        %v1371 = vadd.f32 0.0, %v1370
        %v1372 = vpop.f32.mrb[0].mxu0
        %v1373 = vpop.f32.mrb[0].mxu0
        %v1374 = vadd.f32 0.0, %v1373
        %v1375 = vpop.f32.mrb[0].mxu0
        %1376 = vmatprep.mubr.bf16.mxu0 0
        %1377 = vmatmul.mubr.bf16.gmra.mrb[0].mxu0 %v604
        %v1378 = vpop.f32.mrb[0].mxu0
        %v1379 = vadd.f32 0.0, %v1378
        %v1380 = vpop.f32.mrb[0].mxu0
        %v1381 = vpop.f32.mrb[0].mxu0
        %v1382 = vadd.f32 0.0, %v1381
        %v1383 = vpop.f32.mrb[0].mxu0
        %1384 = vmatprep.mubr.bf16.mxu0 0
        %1385 = vmatmul.mubr.bf16.gmra.mrb[0].mxu0 %v606
        %v1386 = vpop.f32.mrb[0].mxu0
        %v1387 = vadd.f32 0.0, %v1386
        %v1388 = vpop.f32.mrb[0].mxu0
        %v1389 = vpop.f32.mrb[0].mxu0
        %v1390 = vadd.f32 0.0, %v1389
        %v1391 = vpop.f32.mrb[0].mxu0
        %1392 = vmatprep.mubr.bf16.mxu0 0
        %1393 = vmatmul.mubr.bf16.gmra.mrb[0].mxu0 %v608
        %v1394 = vpop.f32.mrb[0].mxu0
        %v1395 = vadd.f32 0.0, %v1394
        %v1396 = vpop.f32.mrb[0].mxu0
        %v1397 = vpop.f32.mrb[0].mxu0
        %v1398 = vadd.f32 0.0, %v1397
        %v1399 = vpop.f32.mrb[0].mxu0
        %1400 = vmatprep.mubr.bf16.mxu0 0
        %1401 = vmatmul.mubr.bf16.gmra.mrb[0].mxu0 %v610
        %v1402 = vpop.f32.mrb[0].mxu0
        %v1403 = vadd.f32 0.0, %v1402
        %v1404 = vpop.f32.mrb[0].mxu0
        %v1405 = vpop.f32.mrb[0].mxu0
        %v1406 = vadd.f32 0.0, %v1405
        %v1407 = vpop.f32.mrb[0].mxu0
        %1408 = vdwg.mxu0
        %v1409 = vadd.f32 %v1231, %v1347
        %v1410 = vadd.f32 %v1232, %v1350
        %v1411 = vadd.f32 %v1233, %v1355
        %v1412 = vadd.f32 %v1234, %v1358
        %v1413 = vadd.f32 %v1235, %v1363
        %v1414 = vadd.f32 %v1236, %v1366
        %v1415 = vadd.f32 %v1237, %v1371
        %v1416 = vadd.f32 %v1238, %v1374
        %v1417 = vadd.f32 %v1239, %v1379
        %v1418 = vadd.f32 %v1240, %v1382
        %v1419 = vadd.f32 %v1241, %v1387
        %v1420 = vadd.f32 %v1242, %v1390
        %v1421 = vadd.f32 %v1243, %v1395
        %v1422 = vadd.f32 %v1244, %v1398
        %v1423 = vadd.f32 %v1245, %v1403
        %v1424 = vadd.f32 %v1246, %v1406
        %s1425 = scalar_lea.vmem [#allocation8], 256
        %v1426 = vld [vmem:[%s1425] sm:$0xf]
        %v1427 = vld [vmem:[%s1425 + $0x4] sm:$0xf]
        %v1428 = vld [vmem:[%s1425 + $0x8] sm:$0xf]
        %v1429 = vld [vmem:[%s1425 + $0xc] sm:$0xf]
        %v1430 = vld [vmem:[%s1425 + $0x10] sm:$0xf]
        %v1431 = vld [vmem:[%s1425 + $0x14] sm:$0xf]
        %v1432 = vld [vmem:[%s1425 + $0x18] sm:$0xf]
        %v1433 = vld [vmem:[%s1425 + $0x1c] sm:$0xf]
        %v1434 = vld [vmem:[%s1425 + $0x20] sm:$0xf]
        %v1435 = vld [vmem:[%s1425 + $0x24] sm:$0xf]
        %v1436 = vld [vmem:[%s1425 + $0x28] sm:$0xf]
        %v1437 = vld [vmem:[%s1425 + $0x2c] sm:$0xf]
        %v1438 = vld [vmem:[%s1425 + $0x30] sm:$0xf]
        %v1439 = vld [vmem:[%s1425 + $0x34] sm:$0xf]
        %v1440 = vld [vmem:[%s1425 + $0x38] sm:$0xf]
        %v1441 = vld [vmem:[%s1425 + $0x3c] sm:$0xf]
        %v1458 = vunpack.c.l.b16 %v1426
        %v1459 = vunpack.c.l.b16 %v1427
        %v1460 = vunpack.c.l.b16 %v1428
        %v1461 = vunpack.c.l.b16 %v1429
        %v1462 = vunpack.c.l.b16 %v1430
        %v1463 = vunpack.c.l.b16 %v1431
        %v1464 = vunpack.c.l.b16 %v1432
        %v1465 = vunpack.c.l.b16 %v1433
        %v1466 = vunpack.c.l.b16 %v1434
        %v1467 = vunpack.c.l.b16 %v1435
        %v1468 = vunpack.c.l.b16 %v1436
        %v1469 = vunpack.c.l.b16 %v1437
        %v1470 = vunpack.c.l.b16 %v1438
        %v1471 = vunpack.c.l.b16 %v1439
        %v1472 = vunpack.c.l.b16 %v1440
        %v1473 = vunpack.c.l.b16 %v1441
        %v1474 = vpack.c.b16 %v1459, %v1458
        %v1475 = vpack.c.b16 %v1461, %v1460
        %v1476 = vpack.c.b16 %v1463, %v1462
        %v1477 = vpack.c.b16 %v1465, %v1464
        %v1478 = vpack.c.b16 %v1467, %v1466
        %v1479 = vpack.c.b16 %v1469, %v1468
        %v1480 = vpack.c.b16 %v1471, %v1470
        %v1481 = vpack.c.b16 %v1473, %v1472
        %1490 = vmatprep.subr.bf16.mxu0 0
        %1491 = vmatpush1.bf16.msra.mxu0 %v1474
        %1492 = vmatprep.subr.bf16.mxu0 0
        %1493 = vmatpush1.bf16.msra.mxu0 %v1475
        %1494 = vmatprep.subr.bf16.mxu0 0
        %1495 = vmatpush1.bf16.msra.mxu0 %v1476
        %1496 = vmatprep.subr.bf16.mxu0 0
        %1497 = vmatpush1.bf16.msra.mxu0 %v1477
        %1498 = vmatprep.subr.bf16.mxu0 0
        %1499 = vmatpush1.bf16.msra.mxu0 %v1478
        %1500 = vmatprep.subr.bf16.mxu0 0
        %1501 = vmatpush1.bf16.msra.mxu0 %v1479
        %1502 = vmatprep.subr.bf16.mxu0 0
        %1503 = vmatpush1.bf16.msra.mxu0 %v1480
        %1504 = vmatprep.subr.bf16.mxu0 0
        %1505 = vmatpush1.bf16.msra.mxu0 %v1481
        %1506 = vmatprep.subr.bf16.mxu0 0
        %1507 = vmatpush1.bf16.msra.mxu0 0
        %1508 = vmatprep.subr.bf16.mxu0 0
        %1509 = vmatpush1.bf16.msra.mxu0 0
        %1510 = vmatprep.subr.bf16.mxu0 0
        %1511 = vmatpush1.bf16.msra.mxu0 0
        %1512 = vmatprep.subr.bf16.mxu0 0
        %1513 = vmatpush1.bf16.msra.mxu0 0
        %1514 = vmatprep.subr.bf16.mxu0 0
        %1515 = vmatpush1.bf16.msra.mxu0 0
        %1516 = vmatprep.subr.bf16.mxu0 0
        %1517 = vmatpush1.bf16.msra.mxu0 0
        %1518 = vmatprep.subr.bf16.mxu0 0
        %1519 = vmatpush1.bf16.msra.mxu0 0
        %1520 = vmatprep.subr.bf16.mxu0 0
        %1521 = vmatpush1.bf16.msra.mxu0 0
        %1522 = vmatprep.mubr.bf16.mxu0 0
        %1523 = vmatmul.mubr.bf16.gmra.mrb[0].mxu0 %v598
        %v1524 = vpop.f32.mrb[0].mxu0
        %v1525 = vadd.f32 0.0, %v1524
        %v1526 = vpop.f32.mrb[0].mxu0
        %v1527 = vpop.f32.mrb[0].mxu0
        %v1528 = vadd.f32 0.0, %v1527
        %v1529 = vpop.f32.mrb[0].mxu0
        %1530 = vmatprep.mubr.bf16.mxu0 0
        %1531 = vmatmul.mubr.bf16.gmra.mrb[0].mxu0 %v600
        %v1532 = vpop.f32.mrb[0].mxu0
        %v1533 = vadd.f32 0.0, %v1532
        %v1534 = vpop.f32.mrb[0].mxu0
        %v1535 = vpop.f32.mrb[0].mxu0
        %v1536 = vadd.f32 0.0, %v1535
        %v1537 = vpop.f32.mrb[0].mxu0
        %1538 = vmatprep.mubr.bf16.mxu0 0
        %1539 = vmatmul.mubr.bf16.gmra.mrb[0].mxu0 %v602
        %v1540 = vpop.f32.mrb[0].mxu0
        %v1541 = vadd.f32 0.0, %v1540
        %v1542 = vpop.f32.mrb[0].mxu0
        %v1543 = vpop.f32.mrb[0].mxu0
        %v1544 = vadd.f32 0.0, %v1543
        %v1545 = vpop.f32.mrb[0].mxu0
        %1546 = vmatprep.mubr.bf16.mxu0 0
        %1547 = vmatmul.mubr.bf16.gmra.mrb[0].mxu0 %v604
        %v1548 = vpop.f32.mrb[0].mxu0
        %v1549 = vadd.f32 0.0, %v1548
        %v1550 = vpop.f32.mrb[0].mxu0
        %v1551 = vpop.f32.mrb[0].mxu0
        %v1552 = vadd.f32 0.0, %v1551
        %v1553 = vpop.f32.mrb[0].mxu0
        %1554 = vmatprep.mubr.bf16.mxu0 0
        %1555 = vmatmul.mubr.bf16.gmra.mrb[0].mxu0 %v606
        %v1556 = vpop.f32.mrb[0].mxu0
        %v1557 = vadd.f32 0.0, %v1556
        %v1558 = vpop.f32.mrb[0].mxu0
        %v1559 = vpop.f32.mrb[0].mxu0
        %v1560 = vadd.f32 0.0, %v1559
        %v1561 = vpop.f32.mrb[0].mxu0
        %1562 = vmatprep.mubr.bf16.mxu0 0
        %1563 = vmatmul.mubr.bf16.gmra.mrb[0].mxu0 %v608
        %v1564 = vpop.f32.mrb[0].mxu0
        %v1565 = vadd.f32 0.0, %v1564
        %v1566 = vpop.f32.mrb[0].mxu0
        %v1567 = vpop.f32.mrb[0].mxu0
        %v1568 = vadd.f32 0.0, %v1567
        %v1569 = vpop.f32.mrb[0].mxu0
        %1570 = vmatprep.mubr.bf16.mxu0 0
        %1571 = vmatmul.mubr.bf16.gmra.mrb[0].mxu0 %v610
        %v1572 = vpop.f32.mrb[0].mxu0
        %v1573 = vadd.f32 0.0, %v1572
        %v1574 = vpop.f32.mrb[0].mxu0
        %v1575 = vpop.f32.mrb[0].mxu0
        %v1576 = vadd.f32 0.0, %v1575
        %v1577 = vpop.f32.mrb[0].mxu0
        %1578 = vmatprep.mubr.bf16.mxu0 0
        %1579 = vmatmul.mubr.bf16.gmra.mrb[0].mxu0 %v612
        %v1580 = vpop.f32.mrb[0].mxu0
        %v1581 = vadd.f32 0.0, %v1580
        %v1582 = vpop.f32.mrb[0].mxu0
        %v1583 = vpop.f32.mrb[0].mxu0
        %v1584 = vadd.f32 0.0, %v1583
        %v1585 = vpop.f32.mrb[0].mxu0
        %1586 = vdwg.mxu0
        %v1587 = vadd.f32 %v1409, %v1525
        %v1588 = vadd.f32 %v1410, %v1528
        %v1589 = vadd.f32 %v1411, %v1533
        %v1590 = vadd.f32 %v1412, %v1536
        %v1591 = vadd.f32 %v1413, %v1541
        %v1592 = vadd.f32 %v1414, %v1544
        %v1593 = vadd.f32 %v1415, %v1549
        %v1594 = vadd.f32 %v1416, %v1552
        %v1595 = vadd.f32 %v1417, %v1557
        %v1596 = vadd.f32 %v1418, %v1560
        %v1597 = vadd.f32 %v1419, %v1565
        %v1598 = vadd.f32 %v1420, %v1568
        %v1599 = vadd.f32 %v1421, %v1573
        %v1600 = vadd.f32 %v1422, %v1576
        %v1601 = vadd.f32 %v1423, %v1581
        %v1602 = vadd.f32 %v1424, %v1584
        %s1603 = scalar_lea.vmem [#allocation8], 448
        %v1604 = vld [vmem:[%s1603] sm:$0xf]
        %v1605 = vld [vmem:[%s1603 + $0x4] sm:$0xf]
        %v1606 = vld [vmem:[%s1603 + $0x8] sm:$0xf]
        %v1607 = vld [vmem:[%s1603 + $0xc] sm:$0xf]
        %v1608 = vld [vmem:[%s1603 + $0x10] sm:$0xf]
        %v1609 = vld [vmem:[%s1603 + $0x14] sm:$0xf]
        %v1610 = vld [vmem:[%s1603 + $0x18] sm:$0xf]
        %v1611 = vld [vmem:[%s1603 + $0x1c] sm:$0xf]
        %v1612 = vld [vmem:[%s1603 + $0x20] sm:$0xf]
        %v1613 = vld [vmem:[%s1603 + $0x24] sm:$0xf]
        %v1614 = vld [vmem:[%s1603 + $0x28] sm:$0xf]
        %v1615 = vld [vmem:[%s1603 + $0x2c] sm:$0xf]
        %v1616 = vld [vmem:[%s1603 + $0x30] sm:$0xf]
        %v1617 = vld [vmem:[%s1603 + $0x34] sm:$0xf]
        %v1618 = vld [vmem:[%s1603 + $0x38] sm:$0xf]
        %v1619 = vld [vmem:[%s1603 + $0x3c] sm:$0xf]
        %v1636 = vunpack.c.l.b16 %v1604
        %v1637 = vunpack.c.l.b16 %v1605
        %v1638 = vunpack.c.l.b16 %v1606
        %v1639 = vunpack.c.l.b16 %v1607
        %v1640 = vunpack.c.l.b16 %v1608
        %v1641 = vunpack.c.l.b16 %v1609
        %v1642 = vunpack.c.l.b16 %v1610
        %v1643 = vunpack.c.l.b16 %v1611
        %v1644 = vunpack.c.l.b16 %v1612
        %v1645 = vunpack.c.l.b16 %v1613
        %v1646 = vunpack.c.l.b16 %v1614
        %v1647 = vunpack.c.l.b16 %v1615
        %v1648 = vunpack.c.l.b16 %v1616
        %v1649 = vunpack.c.l.b16 %v1617
        %v1650 = vunpack.c.l.b16 %v1618
        %v1651 = vunpack.c.l.b16 %v1619
        %v1652 = vpack.c.b16 %v1637, %v1636
        %v1653 = vpack.c.b16 %v1639, %v1638
        %v1654 = vpack.c.b16 %v1641, %v1640
        %v1655 = vpack.c.b16 %v1643, %v1642
        %v1656 = vpack.c.b16 %v1645, %v1644
        %v1657 = vpack.c.b16 %v1647, %v1646
        %v1658 = vpack.c.b16 %v1649, %v1648
        %v1659 = vpack.c.b16 %v1651, %v1650
        %1668 = vmatprep.subr.bf16.mxu0 0
        %1669 = vmatpush1.bf16.msra.mxu0 %v1652
        %1670 = vmatprep.subr.bf16.mxu0 0
        %1671 = vmatpush1.bf16.msra.mxu0 %v1653
        %1672 = vmatprep.subr.bf16.mxu0 0
        %1673 = vmatpush1.bf16.msra.mxu0 %v1654
        %1674 = vmatprep.subr.bf16.mxu0 0
        %1675 = vmatpush1.bf16.msra.mxu0 %v1655
        %1676 = vmatprep.subr.bf16.mxu0 0
        %1677 = vmatpush1.bf16.msra.mxu0 %v1656
        %1678 = vmatprep.subr.bf16.mxu0 0
        %1679 = vmatpush1.bf16.msra.mxu0 %v1657
        %1680 = vmatprep.subr.bf16.mxu0 0
        %1681 = vmatpush1.bf16.msra.mxu0 %v1658
        %1682 = vmatprep.subr.bf16.mxu0 0
        %1683 = vmatpush1.bf16.msra.mxu0 %v1659
        %1684 = vmatprep.subr.bf16.mxu0 0
        %1685 = vmatpush1.bf16.msra.mxu0 0
        %1686 = vmatprep.subr.bf16.mxu0 0
        %1687 = vmatpush1.bf16.msra.mxu0 0
        %1688 = vmatprep.subr.bf16.mxu0 0
        %1689 = vmatpush1.bf16.msra.mxu0 0
        %1690 = vmatprep.subr.bf16.mxu0 0
        %1691 = vmatpush1.bf16.msra.mxu0 0
        %1692 = vmatprep.subr.bf16.mxu0 0
        %1693 = vmatpush1.bf16.msra.mxu0 0
        %1694 = vmatprep.subr.bf16.mxu0 0
        %1695 = vmatpush1.bf16.msra.mxu0 0
        %1696 = vmatprep.subr.bf16.mxu0 0
        %1697 = vmatpush1.bf16.msra.mxu0 0
        %1698 = vmatprep.subr.bf16.mxu0 0
        %1699 = vmatpush1.bf16.msra.mxu0 0
        %1700 = vmatprep.mubr.bf16.mxu0 0
        %1701 = vmatmul.mubr.bf16.gmra.mrb[0].mxu0 %v600
        %v1702 = vpop.f32.mrb[0].mxu0
        %v1703 = vadd.f32 0.0, %v1702
        %v1704 = vpop.f32.mrb[0].mxu0
        %v1705 = vpop.f32.mrb[0].mxu0
        %v1706 = vadd.f32 0.0, %v1705
        %v1707 = vpop.f32.mrb[0].mxu0
        %1708 = vmatprep.mubr.bf16.mxu0 0
        %1709 = vmatmul.mubr.bf16.gmra.mrb[0].mxu0 %v602
        %v1710 = vpop.f32.mrb[0].mxu0
        %v1711 = vadd.f32 0.0, %v1710
        %v1712 = vpop.f32.mrb[0].mxu0
        %v1713 = vpop.f32.mrb[0].mxu0
        %v1714 = vadd.f32 0.0, %v1713
        %v1715 = vpop.f32.mrb[0].mxu0
        %1716 = vmatprep.mubr.bf16.mxu0 0
        %1717 = vmatmul.mubr.bf16.gmra.mrb[0].mxu0 %v604
        %v1718 = vpop.f32.mrb[0].mxu0
        %v1719 = vadd.f32 0.0, %v1718
        %v1720 = vpop.f32.mrb[0].mxu0
        %v1721 = vpop.f32.mrb[0].mxu0
        %v1722 = vadd.f32 0.0, %v1721
        %v1723 = vpop.f32.mrb[0].mxu0
        %1724 = vmatprep.mubr.bf16.mxu0 0
        %1725 = vmatmul.mubr.bf16.gmra.mrb[0].mxu0 %v606
        %v1726 = vpop.f32.mrb[0].mxu0
        %v1727 = vadd.f32 0.0, %v1726
        %v1728 = vpop.f32.mrb[0].mxu0
        %v1729 = vpop.f32.mrb[0].mxu0
        %v1730 = vadd.f32 0.0, %v1729
        %v1731 = vpop.f32.mrb[0].mxu0
        %1732 = vmatprep.mubr.bf16.mxu0 0
        %1733 = vmatmul.mubr.bf16.gmra.mrb[0].mxu0 %v608
        %v1734 = vpop.f32.mrb[0].mxu0
        %v1735 = vadd.f32 0.0, %v1734
        %v1736 = vpop.f32.mrb[0].mxu0
        %v1737 = vpop.f32.mrb[0].mxu0
        %v1738 = vadd.f32 0.0, %v1737
        %v1739 = vpop.f32.mrb[0].mxu0
        %1740 = vmatprep.mubr.bf16.mxu0 0
        %1741 = vmatmul.mubr.bf16.gmra.mrb[0].mxu0 %v610
        %v1742 = vpop.f32.mrb[0].mxu0
        %v1743 = vadd.f32 0.0, %v1742
        %v1744 = vpop.f32.mrb[0].mxu0
        %v1745 = vpop.f32.mrb[0].mxu0
        %v1746 = vadd.f32 0.0, %v1745
        %v1747 = vpop.f32.mrb[0].mxu0
        %1748 = vmatprep.mubr.bf16.mxu0 0
        %1749 = vmatmul.mubr.bf16.gmra.mrb[0].mxu0 %v612
        %v1750 = vpop.f32.mrb[0].mxu0
        %v1751 = vadd.f32 0.0, %v1750
        %v1752 = vpop.f32.mrb[0].mxu0
        %v1753 = vpop.f32.mrb[0].mxu0
        %v1754 = vadd.f32 0.0, %v1753
        %v1755 = vpop.f32.mrb[0].mxu0
        %1756 = vmatprep.mubr.bf16.mxu0 0
        %1757 = vmatmul.mubr.bf16.gmra.mrb[0].mxu0 %v614
        %v1758 = vpop.f32.mrb[0].mxu0
        %v1759 = vadd.f32 0.0, %v1758
        %v1760 = vpop.f32.mrb[0].mxu0
        %v1761 = vpop.f32.mrb[0].mxu0
        %v1762 = vadd.f32 0.0, %v1761
        %v1763 = vpop.f32.mrb[0].mxu0
        %1764 = vdwg.mxu0
        %v1765 = vadd.f32 %v1587, %v1703
        %v1766 = vadd.f32 %v1588, %v1706
        %v1767 = vadd.f32 %v1589, %v1711
        %v1768 = vadd.f32 %v1590, %v1714
        %v1769 = vadd.f32 %v1591, %v1719
        %v1770 = vadd.f32 %v1592, %v1722
        %v1771 = vadd.f32 %v1593, %v1727
        %v1772 = vadd.f32 %v1594, %v1730
        %v1773 = vadd.f32 %v1595, %v1735
        %v1774 = vadd.f32 %v1596, %v1738
        %v1775 = vadd.f32 %v1597, %v1743
        %v1776 = vadd.f32 %v1598, %v1746
        %v1777 = vadd.f32 %v1599, %v1751
        %v1778 = vadd.f32 %v1600, %v1754
        %v1779 = vadd.f32 %v1601, %v1759
        %v1780 = vadd.f32 %v1602, %v1762
        %v1781 = vld [vmem:[#allocation3 + $0x8] sm:$0xff]
        %v1782 = vld [vmem:[#allocation3 + $0x10] sm:$0x1]
        %v1783 = vld [vmem:[#allocation3 + $0x20] sm:$0xff]
        %v1784 = vld [vmem:[#allocation3 + $0x28] sm:$0x1]
        %v1785 = vld [vmem:[#allocation3 + $0x38] sm:$0xff]
        %v1786 = vld [vmem:[#allocation3 + $0x40] sm:$0x1]
        %v1787 = vld [vmem:[#allocation3 + $0x50] sm:$0xff]
        %v1788 = vld [vmem:[#allocation3 + $0x58] sm:$0x1]
        %v1789 = vld [vmem:[#allocation3 + $0x68] sm:$0xff]
        %v1790 = vld [vmem:[#allocation3 + $0x70] sm:$0x1]
        %v1791 = vld [vmem:[#allocation3 + $0x80] sm:$0xff]
        %v1792 = vld [vmem:[#allocation3 + $0x88] sm:$0x1]
        %v1793 = vld [vmem:[#allocation3 + $0x98] sm:$0xff]
        %v1794 = vld [vmem:[#allocation3 + $0xa0] sm:$0x1]
        %v1795 = vld [vmem:[#allocation3 + $0xb0] sm:$0xff]
        %v1796 = vld [vmem:[#allocation3 + $0xb8] sm:$0x1]
        %v1797 = vld [vmem:[#allocation3 + $0xc8] sm:$0xff]
        %v1798 = vld [vmem:[#allocation3 + $0xd0] sm:$0x1]
        %v1799 = vld [vmem:[#allocation3 + $0xe0] sm:$0xff]
        %v1800 = vld [vmem:[#allocation3 + $0xe8] sm:$0x1]
        %vm1801 = vsmask.f32 7424
        %v1803 = vshrl.u32 %v1781, 16
        %v1805 = vshll.u32 %v1781, 16
        %v1807 = vrot.slane %v1805, 1
        %v1808 = vor.u32 %v1803, %v1807
        %v1810 = vshll.u32 %v1782, 16
        %v1812 = vrot.slane %v1810, 1
        %v1813 = vsel %vm1801, %v1808, %v1812
        %v1815 = vshrl.u32 %v1783, 16
        %v1817 = vshll.u32 %v1783, 16
        %v1819 = vrot.slane %v1817, 1
        %v1820 = vor.u32 %v1815, %v1819
        %v1822 = vshll.u32 %v1784, 16
        %v1824 = vrot.slane %v1822, 1
        %v1825 = vsel %vm1801, %v1820, %v1824
        %v1827 = vshrl.u32 %v1785, 16
        %v1829 = vshll.u32 %v1785, 16
        %v1831 = vrot.slane %v1829, 1
        %v1832 = vor.u32 %v1827, %v1831
        %v1834 = vshll.u32 %v1786, 16
        %v1836 = vrot.slane %v1834, 1
        %v1837 = vsel %vm1801, %v1832, %v1836
        %v1839 = vshrl.u32 %v1787, 16
        %v1841 = vshll.u32 %v1787, 16
        %v1843 = vrot.slane %v1841, 1
        %v1844 = vor.u32 %v1839, %v1843
        %v1846 = vshll.u32 %v1788, 16
        %v1848 = vrot.slane %v1846, 1
        %v1849 = vsel %vm1801, %v1844, %v1848
        %v1851 = vshrl.u32 %v1789, 16
        %v1853 = vshll.u32 %v1789, 16
        %v1855 = vrot.slane %v1853, 1
        %v1856 = vor.u32 %v1851, %v1855
        %v1858 = vshll.u32 %v1790, 16
        %v1860 = vrot.slane %v1858, 1
        %v1861 = vsel %vm1801, %v1856, %v1860
        %v1863 = vshrl.u32 %v1791, 16
        %v1865 = vshll.u32 %v1791, 16
        %v1867 = vrot.slane %v1865, 1
        %v1868 = vor.u32 %v1863, %v1867
        %v1870 = vshll.u32 %v1792, 16
        %v1872 = vrot.slane %v1870, 1
        %v1873 = vsel %vm1801, %v1868, %v1872
        %v1875 = vshrl.u32 %v1793, 16
        %v1877 = vshll.u32 %v1793, 16
        %v1879 = vrot.slane %v1877, 1
        %v1880 = vor.u32 %v1875, %v1879
        %v1882 = vshll.u32 %v1794, 16
        %v1884 = vrot.slane %v1882, 1
        %v1885 = vsel %vm1801, %v1880, %v1884
        %v1887 = vshrl.u32 %v1795, 16
        %v1889 = vshll.u32 %v1795, 16
        %v1891 = vrot.slane %v1889, 1
        %v1892 = vor.u32 %v1887, %v1891
        %v1894 = vshll.u32 %v1796, 16
        %v1896 = vrot.slane %v1894, 1
        %v1897 = vsel %vm1801, %v1892, %v1896
        %s1906 = scalar_lea.vmem [#allocation8], 128
        %v1907 = vld [vmem:[%s1906] sm:$0xf]
        %v1908 = vld [vmem:[%s1906 + $0x4] sm:$0xf]
        %v1909 = vld [vmem:[%s1906 + $0x8] sm:$0xf]
        %v1910 = vld [vmem:[%s1906 + $0xc] sm:$0xf]
        %v1911 = vld [vmem:[%s1906 + $0x10] sm:$0xf]
        %v1912 = vld [vmem:[%s1906 + $0x14] sm:$0xf]
        %v1913 = vld [vmem:[%s1906 + $0x18] sm:$0xf]
        %v1914 = vld [vmem:[%s1906 + $0x1c] sm:$0xf]
        %v1915 = vld [vmem:[%s1906 + $0x20] sm:$0xf]
        %v1916 = vld [vmem:[%s1906 + $0x24] sm:$0xf]
        %v1917 = vld [vmem:[%s1906 + $0x28] sm:$0xf]
        %v1918 = vld [vmem:[%s1906 + $0x2c] sm:$0xf]
        %v1919 = vld [vmem:[%s1906 + $0x30] sm:$0xf]
        %v1920 = vld [vmem:[%s1906 + $0x34] sm:$0xf]
        %v1921 = vld [vmem:[%s1906 + $0x38] sm:$0xf]
        %v1922 = vld [vmem:[%s1906 + $0x3c] sm:$0xf]
        %v1939 = vunpack.c.l.b16 %v1907
        %v1940 = vunpack.c.l.b16 %v1908
        %v1941 = vunpack.c.l.b16 %v1909
        %v1942 = vunpack.c.l.b16 %v1910
        %v1943 = vunpack.c.l.b16 %v1911
        %v1944 = vunpack.c.l.b16 %v1912
        %v1945 = vunpack.c.l.b16 %v1913
        %v1946 = vunpack.c.l.b16 %v1914
        %v1947 = vunpack.c.l.b16 %v1915
        %v1948 = vunpack.c.l.b16 %v1916
        %v1949 = vunpack.c.l.b16 %v1917
        %v1950 = vunpack.c.l.b16 %v1918
        %v1951 = vunpack.c.l.b16 %v1919
        %v1952 = vunpack.c.l.b16 %v1920
        %v1953 = vunpack.c.l.b16 %v1921
        %v1954 = vunpack.c.l.b16 %v1922
        %v1955 = vpack.c.b16 %v1940, %v1939
        %v1956 = vpack.c.b16 %v1942, %v1941
        %v1957 = vpack.c.b16 %v1944, %v1943
        %v1958 = vpack.c.b16 %v1946, %v1945
        %v1959 = vpack.c.b16 %v1948, %v1947
        %v1960 = vpack.c.b16 %v1950, %v1949
        %v1961 = vpack.c.b16 %v1952, %v1951
        %v1962 = vpack.c.b16 %v1954, %v1953
        %1971 = vmatprep.subr.bf16.mxu0 0
        %1972 = vmatpush1.bf16.msra.mxu0 %v1955
        %1973 = vmatprep.subr.bf16.mxu0 0
        %1974 = vmatpush1.bf16.msra.mxu0 %v1956
        %1975 = vmatprep.subr.bf16.mxu0 0
        %1976 = vmatpush1.bf16.msra.mxu0 %v1957
        %1977 = vmatprep.subr.bf16.mxu0 0
        %1978 = vmatpush1.bf16.msra.mxu0 %v1958
        %1979 = vmatprep.subr.bf16.mxu0 0
        %1980 = vmatpush1.bf16.msra.mxu0 %v1959
        %1981 = vmatprep.subr.bf16.mxu0 0
        %1982 = vmatpush1.bf16.msra.mxu0 %v1960
        %1983 = vmatprep.subr.bf16.mxu0 0
        %1984 = vmatpush1.bf16.msra.mxu0 %v1961
        %1985 = vmatprep.subr.bf16.mxu0 0
        %1986 = vmatpush1.bf16.msra.mxu0 %v1962
        %1987 = vmatprep.subr.bf16.mxu0 0
        %1988 = vmatpush1.bf16.msra.mxu0 0
        %1989 = vmatprep.subr.bf16.mxu0 0
        %1990 = vmatpush1.bf16.msra.mxu0 0
        %1991 = vmatprep.subr.bf16.mxu0 0
        %1992 = vmatpush1.bf16.msra.mxu0 0
        %1993 = vmatprep.subr.bf16.mxu0 0
        %1994 = vmatpush1.bf16.msra.mxu0 0
        %1995 = vmatprep.subr.bf16.mxu0 0
        %1996 = vmatpush1.bf16.msra.mxu0 0
        %1997 = vmatprep.subr.bf16.mxu0 0
        %1998 = vmatpush1.bf16.msra.mxu0 0
        %1999 = vmatprep.subr.bf16.mxu0 0
        %2000 = vmatpush1.bf16.msra.mxu0 0
        %2001 = vmatprep.subr.bf16.mxu0 0
        %2002 = vmatpush1.bf16.msra.mxu0 0
        %2003 = vmatprep.mubr.bf16.mxu0 0
        %2004 = vmatmul.mubr.bf16.gmra.mrb[0].mxu0 %v1813
        %v2005 = vpop.f32.mrb[0].mxu0
        %v2006 = vadd.f32 0.0, %v2005
        %v2007 = vpop.f32.mrb[0].mxu0
        %v2008 = vpop.f32.mrb[0].mxu0
        %v2009 = vadd.f32 0.0, %v2008
        %v2010 = vpop.f32.mrb[0].mxu0
        %2011 = vmatprep.mubr.bf16.mxu0 0
        %2012 = vmatmul.mubr.bf16.gmra.mrb[0].mxu0 %v1825
        %v2013 = vpop.f32.mrb[0].mxu0
        %v2014 = vadd.f32 0.0, %v2013
        %v2015 = vpop.f32.mrb[0].mxu0
        %v2016 = vpop.f32.mrb[0].mxu0
        %v2017 = vadd.f32 0.0, %v2016
        %v2018 = vpop.f32.mrb[0].mxu0
        %2019 = vmatprep.mubr.bf16.mxu0 0
        %2020 = vmatmul.mubr.bf16.gmra.mrb[0].mxu0 %v1837
        %v2021 = vpop.f32.mrb[0].mxu0
        %v2022 = vadd.f32 0.0, %v2021
        %v2023 = vpop.f32.mrb[0].mxu0
        %v2024 = vpop.f32.mrb[0].mxu0
        %v2025 = vadd.f32 0.0, %v2024
        %v2026 = vpop.f32.mrb[0].mxu0
        %2027 = vmatprep.mubr.bf16.mxu0 0
        %2028 = vmatmul.mubr.bf16.gmra.mrb[0].mxu0 %v1849
        %v2029 = vpop.f32.mrb[0].mxu0
        %v2030 = vadd.f32 0.0, %v2029
        %v2031 = vpop.f32.mrb[0].mxu0
        %v2032 = vpop.f32.mrb[0].mxu0
        %v2033 = vadd.f32 0.0, %v2032
        %v2034 = vpop.f32.mrb[0].mxu0
        %2035 = vmatprep.mubr.bf16.mxu0 0
        %2036 = vmatmul.mubr.bf16.gmra.mrb[0].mxu0 %v1861
        %v2037 = vpop.f32.mrb[0].mxu0
        %v2038 = vadd.f32 0.0, %v2037
        %v2039 = vpop.f32.mrb[0].mxu0
        %v2040 = vpop.f32.mrb[0].mxu0
        %v2041 = vadd.f32 0.0, %v2040
        %v2042 = vpop.f32.mrb[0].mxu0
        %2043 = vmatprep.mubr.bf16.mxu0 0
        %2044 = vmatmul.mubr.bf16.gmra.mrb[0].mxu0 %v1873
        %v2045 = vpop.f32.mrb[0].mxu0
        %v2046 = vadd.f32 0.0, %v2045
        %v2047 = vpop.f32.mrb[0].mxu0
        %v2048 = vpop.f32.mrb[0].mxu0
        %v2049 = vadd.f32 0.0, %v2048
        %v2050 = vpop.f32.mrb[0].mxu0
        %2051 = vmatprep.mubr.bf16.mxu0 0
        %2052 = vmatmul.mubr.bf16.gmra.mrb[0].mxu0 %v1885
        %v2053 = vpop.f32.mrb[0].mxu0
        %v2054 = vadd.f32 0.0, %v2053
        %v2055 = vpop.f32.mrb[0].mxu0
        %v2056 = vpop.f32.mrb[0].mxu0
        %v2057 = vadd.f32 0.0, %v2056
        %v2058 = vpop.f32.mrb[0].mxu0
        %2059 = vmatprep.mubr.bf16.mxu0 0
        %2060 = vmatmul.mubr.bf16.gmra.mrb[0].mxu0 %v1897
        %v2061 = vpop.f32.mrb[0].mxu0
        %v2062 = vadd.f32 0.0, %v2061
        %v2063 = vpop.f32.mrb[0].mxu0
        %v2064 = vpop.f32.mrb[0].mxu0
        %v2065 = vadd.f32 0.0, %v2064
        %v2066 = vpop.f32.mrb[0].mxu0
        %2067 = vdwg.mxu0
        %v2068 = vadd.f32 %v1765, %v2006
        %v2069 = vadd.f32 %v1766, %v2009
        %v2070 = vadd.f32 %v1767, %v2014
        %v2071 = vadd.f32 %v1768, %v2017
        %v2072 = vadd.f32 %v1769, %v2022
        %v2073 = vadd.f32 %v1770, %v2025
        %v2074 = vadd.f32 %v1771, %v2030
        %v2075 = vadd.f32 %v1772, %v2033
        %v2076 = vadd.f32 %v1773, %v2038
        %v2077 = vadd.f32 %v1774, %v2041
        %v2078 = vadd.f32 %v1775, %v2046
        %v2079 = vadd.f32 %v1776, %v2049
        %v2080 = vadd.f32 %v1777, %v2054
        %v2081 = vadd.f32 %v1778, %v2057
        %v2082 = vadd.f32 %v1779, %v2062
        %v2083 = vadd.f32 %v1780, %v2065
        %v2085 = vshrl.u32 %v1797, 16
        %v2087 = vshll.u32 %v1797, 16
        %v2089 = vrot.slane %v2087, 1
        %v2090 = vor.u32 %v2085, %v2089
        %v2092 = vshll.u32 %v1798, 16
        %v2094 = vrot.slane %v2092, 1
        %v2095 = vsel %vm1801, %v2090, %v2094
        %s2097 = scalar_lea.vmem [#allocation8], 320
        %v2098 = vld [vmem:[%s2097] sm:$0xf]
        %v2099 = vld [vmem:[%s2097 + $0x4] sm:$0xf]
        %v2100 = vld [vmem:[%s2097 + $0x8] sm:$0xf]
        %v2101 = vld [vmem:[%s2097 + $0xc] sm:$0xf]
        %v2102 = vld [vmem:[%s2097 + $0x10] sm:$0xf]
        %v2103 = vld [vmem:[%s2097 + $0x14] sm:$0xf]
        %v2104 = vld [vmem:[%s2097 + $0x18] sm:$0xf]
        %v2105 = vld [vmem:[%s2097 + $0x1c] sm:$0xf]
        %v2106 = vld [vmem:[%s2097 + $0x20] sm:$0xf]
        %v2107 = vld [vmem:[%s2097 + $0x24] sm:$0xf]
        %v2108 = vld [vmem:[%s2097 + $0x28] sm:$0xf]
        %v2109 = vld [vmem:[%s2097 + $0x2c] sm:$0xf]
        %v2110 = vld [vmem:[%s2097 + $0x30] sm:$0xf]
        %v2111 = vld [vmem:[%s2097 + $0x34] sm:$0xf]
        %v2112 = vld [vmem:[%s2097 + $0x38] sm:$0xf]
        %v2113 = vld [vmem:[%s2097 + $0x3c] sm:$0xf]
        %v2130 = vunpack.c.l.b16 %v2098
        %v2131 = vunpack.c.l.b16 %v2099
        %v2132 = vunpack.c.l.b16 %v2100
        %v2133 = vunpack.c.l.b16 %v2101
        %v2134 = vunpack.c.l.b16 %v2102
        %v2135 = vunpack.c.l.b16 %v2103
        %v2136 = vunpack.c.l.b16 %v2104
        %v2137 = vunpack.c.l.b16 %v2105
        %v2138 = vunpack.c.l.b16 %v2106
        %v2139 = vunpack.c.l.b16 %v2107
        %v2140 = vunpack.c.l.b16 %v2108
        %v2141 = vunpack.c.l.b16 %v2109
        %v2142 = vunpack.c.l.b16 %v2110
        %v2143 = vunpack.c.l.b16 %v2111
        %v2144 = vunpack.c.l.b16 %v2112
        %v2145 = vunpack.c.l.b16 %v2113
        %v2146 = vpack.c.b16 %v2131, %v2130
        %v2147 = vpack.c.b16 %v2133, %v2132
        %v2148 = vpack.c.b16 %v2135, %v2134
        %v2149 = vpack.c.b16 %v2137, %v2136
        %v2150 = vpack.c.b16 %v2139, %v2138
        %v2151 = vpack.c.b16 %v2141, %v2140
        %v2152 = vpack.c.b16 %v2143, %v2142
        %v2153 = vpack.c.b16 %v2145, %v2144
        %2162 = vmatprep.subr.bf16.mxu0 0
        %2163 = vmatpush1.bf16.msra.mxu0 %v2146
        %2164 = vmatprep.subr.bf16.mxu0 0
        %2165 = vmatpush1.bf16.msra.mxu0 %v2147
        %2166 = vmatprep.subr.bf16.mxu0 0
        %2167 = vmatpush1.bf16.msra.mxu0 %v2148
        %2168 = vmatprep.subr.bf16.mxu0 0
        %2169 = vmatpush1.bf16.msra.mxu0 %v2149
        %2170 = vmatprep.subr.bf16.mxu0 0
        %2171 = vmatpush1.bf16.msra.mxu0 %v2150
        %2172 = vmatprep.subr.bf16.mxu0 0
        %2173 = vmatpush1.bf16.msra.mxu0 %v2151
        %2174 = vmatprep.subr.bf16.mxu0 0
        %2175 = vmatpush1.bf16.msra.mxu0 %v2152
        %2176 = vmatprep.subr.bf16.mxu0 0
        %2177 = vmatpush1.bf16.msra.mxu0 %v2153
        %2178 = vmatprep.subr.bf16.mxu0 0
        %2179 = vmatpush1.bf16.msra.mxu0 0
        %2180 = vmatprep.subr.bf16.mxu0 0
        %2181 = vmatpush1.bf16.msra.mxu0 0
        %2182 = vmatprep.subr.bf16.mxu0 0
        %2183 = vmatpush1.bf16.msra.mxu0 0
        %2184 = vmatprep.subr.bf16.mxu0 0
        %2185 = vmatpush1.bf16.msra.mxu0 0
        %2186 = vmatprep.subr.bf16.mxu0 0
        %2187 = vmatpush1.bf16.msra.mxu0 0
        %2188 = vmatprep.subr.bf16.mxu0 0
        %2189 = vmatpush1.bf16.msra.mxu0 0
        %2190 = vmatprep.subr.bf16.mxu0 0
        %2191 = vmatpush1.bf16.msra.mxu0 0
        %2192 = vmatprep.subr.bf16.mxu0 0
        %2193 = vmatpush1.bf16.msra.mxu0 0
        %2194 = vmatprep.mubr.bf16.mxu0 0
        %2195 = vmatmul.mubr.bf16.gmra.mrb[0].mxu0 %v1825
        %v2196 = vpop.f32.mrb[0].mxu0
        %v2197 = vadd.f32 0.0, %v2196
        %v2198 = vpop.f32.mrb[0].mxu0
        %v2199 = vpop.f32.mrb[0].mxu0
        %v2200 = vadd.f32 0.0, %v2199
        %v2201 = vpop.f32.mrb[0].mxu0
        %2202 = vmatprep.mubr.bf16.mxu0 0
        %2203 = vmatmul.mubr.bf16.gmra.mrb[0].mxu0 %v1837
        %v2204 = vpop.f32.mrb[0].mxu0
        %v2205 = vadd.f32 0.0, %v2204
        %v2206 = vpop.f32.mrb[0].mxu0
        %v2207 = vpop.f32.mrb[0].mxu0
        %v2208 = vadd.f32 0.0, %v2207
        %v2209 = vpop.f32.mrb[0].mxu0
        %2210 = vmatprep.mubr.bf16.mxu0 0
        %2211 = vmatmul.mubr.bf16.gmra.mrb[0].mxu0 %v1849
        %v2212 = vpop.f32.mrb[0].mxu0
        %v2213 = vadd.f32 0.0, %v2212
        %v2214 = vpop.f32.mrb[0].mxu0
        %v2215 = vpop.f32.mrb[0].mxu0
        %v2216 = vadd.f32 0.0, %v2215
        %v2217 = vpop.f32.mrb[0].mxu0
        %2218 = vmatprep.mubr.bf16.mxu0 0
        %2219 = vmatmul.mubr.bf16.gmra.mrb[0].mxu0 %v1861
        %v2220 = vpop.f32.mrb[0].mxu0
        %v2221 = vadd.f32 0.0, %v2220
        %v2222 = vpop.f32.mrb[0].mxu0
        %v2223 = vpop.f32.mrb[0].mxu0
        %v2224 = vadd.f32 0.0, %v2223
        %v2225 = vpop.f32.mrb[0].mxu0
        %2226 = vmatprep.mubr.bf16.mxu0 0
        %2227 = vmatmul.mubr.bf16.gmra.mrb[0].mxu0 %v1873
        %v2228 = vpop.f32.mrb[0].mxu0
        %v2229 = vadd.f32 0.0, %v2228
        %v2230 = vpop.f32.mrb[0].mxu0
        %v2231 = vpop.f32.mrb[0].mxu0
        %v2232 = vadd.f32 0.0, %v2231
        %v2233 = vpop.f32.mrb[0].mxu0
        %2234 = vmatprep.mubr.bf16.mxu0 0
        %2235 = vmatmul.mubr.bf16.gmra.mrb[0].mxu0 %v1885
        %v2236 = vpop.f32.mrb[0].mxu0
        %v2237 = vadd.f32 0.0, %v2236
        %v2238 = vpop.f32.mrb[0].mxu0
        %v2239 = vpop.f32.mrb[0].mxu0
        %v2240 = vadd.f32 0.0, %v2239
        %v2241 = vpop.f32.mrb[0].mxu0
        %2242 = vmatprep.mubr.bf16.mxu0 0
        %2243 = vmatmul.mubr.bf16.gmra.mrb[0].mxu0 %v1897
        %v2244 = vpop.f32.mrb[0].mxu0
        %v2245 = vadd.f32 0.0, %v2244
        %v2246 = vpop.f32.mrb[0].mxu0
        %v2247 = vpop.f32.mrb[0].mxu0
        %v2248 = vadd.f32 0.0, %v2247
        %v2249 = vpop.f32.mrb[0].mxu0
        %2250 = vmatprep.mubr.bf16.mxu0 0
        %2251 = vmatmul.mubr.bf16.gmra.mrb[0].mxu0 %v2095
        %v2252 = vpop.f32.mrb[0].mxu0
        %v2253 = vadd.f32 0.0, %v2252
        %v2254 = vpop.f32.mrb[0].mxu0
        %v2255 = vpop.f32.mrb[0].mxu0
        %v2256 = vadd.f32 0.0, %v2255
        %v2257 = vpop.f32.mrb[0].mxu0
        %2258 = vdwg.mxu0
        %v2259 = vadd.f32 %v2068, %v2197
        %v2260 = vadd.f32 %v2069, %v2200
        %v2261 = vadd.f32 %v2070, %v2205
        %v2262 = vadd.f32 %v2071, %v2208
        %v2263 = vadd.f32 %v2072, %v2213
        %v2264 = vadd.f32 %v2073, %v2216
        %v2265 = vadd.f32 %v2074, %v2221
        %v2266 = vadd.f32 %v2075, %v2224
        %v2267 = vadd.f32 %v2076, %v2229
        %v2268 = vadd.f32 %v2077, %v2232
        %v2269 = vadd.f32 %v2078, %v2237
        %v2270 = vadd.f32 %v2079, %v2240
        %v2271 = vadd.f32 %v2080, %v2245
        %v2272 = vadd.f32 %v2081, %v2248
        %v2273 = vadd.f32 %v2082, %v2253
        %v2274 = vadd.f32 %v2083, %v2256
        %v2276 = vshrl.u32 %v1799, 16
        %v2278 = vshll.u32 %v1799, 16
        %v2280 = vrot.slane %v2278, 1
        %v2281 = vor.u32 %v2276, %v2280
        %v2283 = vshll.u32 %v1800, 16
        %v2285 = vrot.slane %v2283, 1
        %v2286 = vsel %vm1801, %v2281, %v2285
        %s2288 = scalar_lea.vmem [#allocation8], 512
        %v2289 = vld [vmem:[%s2288] sm:$0xf]
        %v2290 = vld [vmem:[%s2288 + $0x4] sm:$0xf]
        %v2291 = vld [vmem:[%s2288 + $0x8] sm:$0xf]
        %v2292 = vld [vmem:[%s2288 + $0xc] sm:$0xf]
        %v2293 = vld [vmem:[%s2288 + $0x10] sm:$0xf]
        %v2294 = vld [vmem:[%s2288 + $0x14] sm:$0xf]
        %v2295 = vld [vmem:[%s2288 + $0x18] sm:$0xf]
        %v2296 = vld [vmem:[%s2288 + $0x1c] sm:$0xf]
        %v2297 = vld [vmem:[%s2288 + $0x20] sm:$0xf]
        %v2298 = vld [vmem:[%s2288 + $0x24] sm:$0xf]
        %v2299 = vld [vmem:[%s2288 + $0x28] sm:$0xf]
        %v2300 = vld [vmem:[%s2288 + $0x2c] sm:$0xf]
        %v2301 = vld [vmem:[%s2288 + $0x30] sm:$0xf]
        %v2302 = vld [vmem:[%s2288 + $0x34] sm:$0xf]
        %v2303 = vld [vmem:[%s2288 + $0x38] sm:$0xf]
        %v2304 = vld [vmem:[%s2288 + $0x3c] sm:$0xf]
        %v2321 = vunpack.c.l.b16 %v2289
        %v2322 = vunpack.c.l.b16 %v2290
        %v2323 = vunpack.c.l.b16 %v2291
        %v2324 = vunpack.c.l.b16 %v2292
        %v2325 = vunpack.c.l.b16 %v2293
        %v2326 = vunpack.c.l.b16 %v2294
        %v2327 = vunpack.c.l.b16 %v2295
        %v2328 = vunpack.c.l.b16 %v2296
        %v2329 = vunpack.c.l.b16 %v2297
        %v2330 = vunpack.c.l.b16 %v2298
        %v2331 = vunpack.c.l.b16 %v2299
        %v2332 = vunpack.c.l.b16 %v2300
        %v2333 = vunpack.c.l.b16 %v2301
        %v2334 = vunpack.c.l.b16 %v2302
        %v2335 = vunpack.c.l.b16 %v2303
        %v2336 = vunpack.c.l.b16 %v2304
        %v2337 = vpack.c.b16 %v2322, %v2321
        %v2338 = vpack.c.b16 %v2324, %v2323
        %v2339 = vpack.c.b16 %v2326, %v2325
        %v2340 = vpack.c.b16 %v2328, %v2327
        %v2341 = vpack.c.b16 %v2330, %v2329
        %v2342 = vpack.c.b16 %v2332, %v2331
        %v2343 = vpack.c.b16 %v2334, %v2333
        %v2344 = vpack.c.b16 %v2336, %v2335
        %2353 = vmatprep.subr.bf16.mxu0 0
        %2354 = vmatpush1.bf16.msra.mxu0 %v2337
        %2355 = vmatprep.subr.bf16.mxu0 0
        %2356 = vmatpush1.bf16.msra.mxu0 %v2338
        %2357 = vmatprep.subr.bf16.mxu0 0
        %2358 = vmatpush1.bf16.msra.mxu0 %v2339
        %2359 = vmatprep.subr.bf16.mxu0 0
        %2360 = vmatpush1.bf16.msra.mxu0 %v2340
        %2361 = vmatprep.subr.bf16.mxu0 0
        %2362 = vmatpush1.bf16.msra.mxu0 %v2341
        %2363 = vmatprep.subr.bf16.mxu0 0
        %2364 = vmatpush1.bf16.msra.mxu0 %v2342
        %2365 = vmatprep.subr.bf16.mxu0 0
        %2366 = vmatpush1.bf16.msra.mxu0 %v2343
        %2367 = vmatprep.subr.bf16.mxu0 0
        %2368 = vmatpush1.bf16.msra.mxu0 %v2344
        %2369 = vmatprep.subr.bf16.mxu0 0
        %2370 = vmatpush1.bf16.msra.mxu0 0
        %2371 = vmatprep.subr.bf16.mxu0 0
        %2372 = vmatpush1.bf16.msra.mxu0 0
        %2373 = vmatprep.subr.bf16.mxu0 0
        %2374 = vmatpush1.bf16.msra.mxu0 0
        %2375 = vmatprep.subr.bf16.mxu0 0
        %2376 = vmatpush1.bf16.msra.mxu0 0
        %2377 = vmatprep.subr.bf16.mxu0 0
        %2378 = vmatpush1.bf16.msra.mxu0 0
        %2379 = vmatprep.subr.bf16.mxu0 0
        %2380 = vmatpush1.bf16.msra.mxu0 0
        %2381 = vmatprep.subr.bf16.mxu0 0
        %2382 = vmatpush1.bf16.msra.mxu0 0
        %2383 = vmatprep.subr.bf16.mxu0 0
        %2384 = vmatpush1.bf16.msra.mxu0 0
        %2385 = vmatprep.mubr.bf16.mxu0 0
        %2386 = vmatmul.mubr.bf16.gmra.mrb[0].mxu0 %v1837
        %v2387 = vpop.f32.mrb[0].mxu0
        %v2388 = vadd.f32 0.0, %v2387
        %v2389 = vpop.f32.mrb[0].mxu0
        %v2390 = vpop.f32.mrb[0].mxu0
        %v2391 = vadd.f32 0.0, %v2390
        %v2392 = vpop.f32.mrb[0].mxu0
        %2393 = vmatprep.mubr.bf16.mxu0 0
        %2394 = vmatmul.mubr.bf16.gmra.mrb[0].mxu0 %v1849
        %v2395 = vpop.f32.mrb[0].mxu0
        %v2396 = vadd.f32 0.0, %v2395
        %v2397 = vpop.f32.mrb[0].mxu0
        %v2398 = vpop.f32.mrb[0].mxu0
        %v2399 = vadd.f32 0.0, %v2398
        %v2400 = vpop.f32.mrb[0].mxu0
        %2401 = vmatprep.mubr.bf16.mxu0 0
        %2402 = vmatmul.mubr.bf16.gmra.mrb[0].mxu0 %v1861
        %v2403 = vpop.f32.mrb[0].mxu0
        %v2404 = vadd.f32 0.0, %v2403
        %v2405 = vpop.f32.mrb[0].mxu0
        %v2406 = vpop.f32.mrb[0].mxu0
        %v2407 = vadd.f32 0.0, %v2406
        %v2408 = vpop.f32.mrb[0].mxu0
        %2409 = vmatprep.mubr.bf16.mxu0 0
        %2410 = vmatmul.mubr.bf16.gmra.mrb[0].mxu0 %v1873
        %v2411 = vpop.f32.mrb[0].mxu0
        %v2412 = vadd.f32 0.0, %v2411
        %v2413 = vpop.f32.mrb[0].mxu0
        %v2414 = vpop.f32.mrb[0].mxu0
        %v2415 = vadd.f32 0.0, %v2414
        %v2416 = vpop.f32.mrb[0].mxu0
        %2417 = vmatprep.mubr.bf16.mxu0 0
        %2418 = vmatmul.mubr.bf16.gmra.mrb[0].mxu0 %v1885
        %v2419 = vpop.f32.mrb[0].mxu0
        %v2420 = vadd.f32 0.0, %v2419
        %v2421 = vpop.f32.mrb[0].mxu0
        %v2422 = vpop.f32.mrb[0].mxu0
        %v2423 = vadd.f32 0.0, %v2422
        %v2424 = vpop.f32.mrb[0].mxu0
        %2425 = vmatprep.mubr.bf16.mxu0 0
        %2426 = vmatmul.mubr.bf16.gmra.mrb[0].mxu0 %v1897
        %v2427 = vpop.f32.mrb[0].mxu0
        %v2428 = vadd.f32 0.0, %v2427
        %v2429 = vpop.f32.mrb[0].mxu0
        %v2430 = vpop.f32.mrb[0].mxu0
        %v2431 = vadd.f32 0.0, %v2430
        %v2432 = vpop.f32.mrb[0].mxu0
        %2433 = vmatprep.mubr.bf16.mxu0 0
        %2434 = vmatmul.mubr.bf16.gmra.mrb[0].mxu0 %v2095
        %v2435 = vpop.f32.mrb[0].mxu0
        %v2436 = vadd.f32 0.0, %v2435
        %v2437 = vpop.f32.mrb[0].mxu0
        %v2438 = vpop.f32.mrb[0].mxu0
        %v2439 = vadd.f32 0.0, %v2438
        %v2440 = vpop.f32.mrb[0].mxu0
        %2441 = vmatprep.mubr.bf16.mxu0 0
        %2442 = vmatmul.mubr.bf16.gmra.mrb[0].mxu0 %v2286
        %v2443 = vpop.f32.mrb[0].mxu0
        %v2444 = vadd.f32 0.0, %v2443
        %v2445 = vpop.f32.mrb[0].mxu0
        %v2446 = vpop.f32.mrb[0].mxu0
        %v2447 = vadd.f32 0.0, %v2446
        %v2448 = vpop.f32.mrb[0].mxu0
        %2449 = vdwg.mxu0
        %v2450 = vadd.f32 %v2259, %v2388
        %v2451 = vadd.f32 %v2260, %v2391
        %v2452 = vadd.f32 %v2261, %v2396
        %v2453 = vadd.f32 %v2262, %v2399
        %v2454 = vadd.f32 %v2263, %v2404
        %v2455 = vadd.f32 %v2264, %v2407
        %v2456 = vadd.f32 %v2265, %v2412
        %v2457 = vadd.f32 %v2266, %v2415
        %v2458 = vadd.f32 %v2267, %v2420
        %v2459 = vadd.f32 %v2268, %v2423
        %v2460 = vadd.f32 %v2269, %v2428
        %v2461 = vadd.f32 %v2270, %v2431
        %v2462 = vadd.f32 %v2271, %v2436
        %v2463 = vadd.f32 %v2272, %v2439
        %v2464 = vadd.f32 %v2273, %v2444
        %v2465 = vadd.f32 %v2274, %v2447
        %v2466 = vmax.f32 %v2450, 0.0
        %v2467 = vmax.f32 %v2451, 0.0
        %v2468 = vmax.f32 %v2452, 0.0
        %v2469 = vmax.f32 %v2453, 0.0
        %v2470 = vmax.f32 %v2454, 0.0
        %v2471 = vmax.f32 %v2455, 0.0
        %v2472 = vmax.f32 %v2456, 0.0
        %v2473 = vmax.f32 %v2457, 0.0
        %v2474 = vmax.f32 %v2458, 0.0
        %v2475 = vmax.f32 %v2459, 0.0
        %v2476 = vmax.f32 %v2460, 0.0
        %v2477 = vmax.f32 %v2461, 0.0
        %v2478 = vmax.f32 %v2462, 0.0
        %v2479 = vmax.f32 %v2463, 0.0
        %v2480 = vmax.f32 %v2464, 0.0
        %v2481 = vmax.f32 %v2465, 0.0
        %v2482 = vpack.c.bf16 %v2467, %v2466
        %v2483 = vpack.c.bf16 %v2469, %v2468
        %v2484 = vpack.c.bf16 %v2471, %v2470
        %v2485 = vpack.c.bf16 %v2473, %v2472
        %v2486 = vpack.c.bf16 %v2475, %v2474
        %v2487 = vpack.c.bf16 %v2477, %v2476
        %v2488 = vpack.c.bf16 %v2479, %v2478
        %v2489 = vpack.c.bf16 %v2481, %v2480
        %v2498 = vunpack.c.l.b16 %v2482
        %v2499 = vunpack.c.h.b16 %v2482
        %v2500 = vunpack.c.l.b16 %v2483
        %v2501 = vunpack.c.h.b16 %v2483
        %v2502 = vunpack.c.l.b16 %v2484
        %v2503 = vunpack.c.h.b16 %v2484
        %v2504 = vunpack.c.l.b16 %v2485
        %v2505 = vunpack.c.h.b16 %v2485
        %v2506 = vunpack.c.l.b16 %v2486
        %v2507 = vunpack.c.h.b16 %v2486
        %v2508 = vunpack.c.l.b16 %v2487
        %v2509 = vunpack.c.h.b16 %v2487
        %v2510 = vunpack.c.l.b16 %v2488
        %v2511 = vunpack.c.h.b16 %v2488
        %v2512 = vunpack.c.l.b16 %v2489
        %v2513 = vunpack.c.h.b16 %v2489
        %v2514 = vpack.c.b16 %v2498, %v2498
        %v2515 = vpack.c.b16 %v2499, %v2499
        %v2516 = vpack.c.b16 %v2500, %v2500
        %v2517 = vpack.c.b16 %v2501, %v2501
        %v2518 = vpack.c.b16 %v2502, %v2502
        %v2519 = vpack.c.b16 %v2503, %v2503
        %v2520 = vpack.c.b16 %v2504, %v2504
        %v2521 = vpack.c.b16 %v2505, %v2505
        %v2522 = vpack.c.b16 %v2506, %v2506
        %v2523 = vpack.c.b16 %v2507, %v2507
        %v2524 = vpack.c.b16 %v2508, %v2508
        %v2525 = vpack.c.b16 %v2509, %v2509
        %v2526 = vpack.c.b16 %v2510, %v2510
        %v2527 = vpack.c.b16 %v2511, %v2511
        %v2528 = vpack.c.b16 %v2512, %v2512
        %v2529 = vpack.c.b16 %v2513, %v2513
        %2546 = vst [vmem:[%s193] sm:$0xf] %v2514
        %2547 = vst [vmem:[%s193 + $0x4] sm:$0xf] %v2515
        %2548 = vst [vmem:[%s193 + $0x8] sm:$0xf] %v2516
        %2549 = vst [vmem:[%s193 + $0xc] sm:$0xf] %v2517
        %2550 = vst [vmem:[%s193 + $0x10] sm:$0xf] %v2518
        %2551 = vst [vmem:[%s193 + $0x14] sm:$0xf] %v2519
        %2552 = vst [vmem:[%s193 + $0x18] sm:$0xf] %v2520
        %2553 = vst [vmem:[%s193 + $0x1c] sm:$0xf] %v2521
        %2554 = vst [vmem:[%s193 + $0x20] sm:$0xf] %v2522
        %2555 = vst [vmem:[%s193 + $0x24] sm:$0xf] %v2523
        %2556 = vst [vmem:[%s193 + $0x28] sm:$0xf] %v2524
        %2557 = vst [vmem:[%s193 + $0x2c] sm:$0xf] %v2525
        %2558 = vst [vmem:[%s193 + $0x30] sm:$0xf] %v2526
        %2559 = vst [vmem:[%s193 + $0x34] sm:$0xf] %v2527
        %2560 = vst [vmem:[%s193 + $0x38] sm:$0xf] %v2528
        %2561 = vst [vmem:[%s193 + $0x3c] sm:$0xf] %v2529
        %s2562 = sand.u32 %s105, 1
        %s2563 = scalar_lea.sflag [#allocation7], %s2562
        %s2564 = sand.u32 %s105, 1
        %s2565 = smul.addr %s2564, 64
        %s2566 = scalar_lea.vmem [#allocation10], %s2565
        // Predicated region
        $region69: #{tpu_custom_call.1} parent=31 // pred_check
          %p2567 = pneg %p115
        $region70: #{tpu_custom_call.1} parent=31 // pred_check_branch
          %2569 = sbr.rel (%p2567) target = $region72
        $region71: #{tpu_custom_call.1} parent=31 // pred_region
          %s2570 = smul.u32 8, %s25
          %s2572 = ssub.s32 1024, 1024
          %2573 = vsyncadd %s2563, %s2572
          %s2574 = smul.addr %s2570, 2
          %s2575 = smul.addr %s24, 32
          %s2576 = sadd.s32 %s2574, %s2575
          %s2577 = smul.addr %s2576, 64
          %s2578 = scalar_lea.hbm %s4, %s2577
          %s2579 = sshll.u32 %s2566, 4
          %s2580 = int_to_ptr.vmem [resolvable:$true] %s2579
          %2585 = dma.vmem_to_hbm [thread:$0]  %s2580, 1024, %s2578, %s2563, 64, 64, 4
        $region72: #{tpu_custom_call.1} parent=31 // pred_fallthru
          _
      $region32: #{tpu_custom_call.1} parent=5 // pred_fallthru
        _
      %p2586 = scmp.le.s32.totalorder 2, %s15
      // Predicated region
      $region73: #{tpu_custom_call.1} parent=5 // pred_check
        %p2587 = pneg %p2586
      $region74: #{tpu_custom_call.1} parent=5 // pred_check_branch
        %2589 = sbr.rel (%p2587) target = $region76
      $region75: #{tpu_custom_call.1} parent=5 // pred_region
        %s2590 = ssub.s32 %s15, 2
        // Predicated region
        $region77: #{tpu_custom_call.1} parent=75 // pred_check
          %p2591 = pneg %p121
        $region78: #{tpu_custom_call.1} parent=75 // pred_check_branch
          %2593 = sbr.rel (%p2591) target = $region80
        $region79: #{tpu_custom_call.1} parent=75 // pred_region
          %s2594 = sand.u32 %s106, 1
          %s2595 = scalar_lea.sflag [#allocation7], %s2594
          %s2596 = sand.u32 %s106, 1
          %s2597 = smul.addr %s2596, 64
          %s2598 = scalar_lea.vmem [#allocation10], %s2597
          %2599 = dma.done %s2595, 1024
        $region80: #{tpu_custom_call.1} parent=75 // pred_fallthru
          _
      $region76: #{tpu_custom_call.1} parent=5 // pred_fallthru
        _
    $region6: #{tpu_custom_call.1} parent=1 // loop_footer
      %s19 = sadd.s32 1, %s15
    $region7: #{tpu_custom_call.1} parent=1 // loop_footer_branch
      %14 = sbr.rel target = $region3
    $region8: #{tpu_custom_call.1} parent=1 // loop_exit
      _
    %2600 = vsyncpa [#allocation6], 1
    %s2601 = scalar_lea.sflag [#allocation6], 1
    %2602 = vsyncpa %s2601, 1
    %2603 = vsyncpa [#allocation9], 1
    %2604 = vsyncpa [#allocation7], 1
    %s2605 = scalar_lea.sflag [#allocation7], 1
    %2606 = vsyncpa %s2605, 1
  %2607 = vsyncmov [#allocation4]
  %s2608 = vpop.sfrf %2607
  %p2609 = scmp.eq.s32.totalorder %s2608, 0
  %p2610 = pneg %p2609
  %2612 = shalt.err (%p2610)
  %s2613 = scalar_lea.sflag [#allocation4], 1
  %2614 = vsyncmov %s2613
  %s2615 = vpop.sfrf %2614
  %p2616 = scmp.eq.s32.totalorder %s2615, 0
  %p2617 = pneg %p2616
  %2619 = shalt.err (%p2617)
  %s2620 = scalar_lea.sflag [#allocation4], 2
  %2621 = vsyncmov %s2620
  %s2622 = vpop.sfrf %2621
  %p2623 = scmp.eq.s32.totalorder %s2622, 0
  %p2624 = pneg %p2623
  %2626 = shalt.err (%p2624)

</llo_original>
